<compile_context>
chip_gen: v6e
topology: v6e:2x2x1
jax: 0.10.0
libtpu: 0.0.40
codegen_flags: <defaults>
</compile_context>

<pallas_src>
import jax
import jax.numpy as jnp
from jax import lax
from jax.experimental import pallas as pl
from jax.experimental.pallas import tpu as pltpu


# -----------------------------------------------------------------------------
# Model hyper-parameters (small, consistent with the nn.Module forward).
# -----------------------------------------------------------------------------
SEQ_LEN = 16          # input_shape[0]  (L)
N_FEATURES = 8        # input_shape[1]  (Conv1d in_channels)
N_ACTIONS = 3
BATCH = 4

C1, K1 = 32, 7
C2, K2 = 64, 3
C3, K3 = 128, 3
EMB_DIM = 32
FC_DIM = 128
HID = 64

L1 = SEQ_LEN - K1 + 1     # 10 valid rows after conv1
L2 = L1 - K2 + 1          # 8  valid rows after conv2
L3 = L2 - K3 + 1          # 6  valid rows after conv3

LANES = 128               # every in-kernel operand is carried 128-lane dense
LPAD = SEQ_LEN            # rows carried per sample through the conv stack
_LPAD_SHIFT = LPAD.bit_length() - 1
_LPAD_MASK = LPAD - 1
assert LPAD % 8 == 0 and (LPAD & _LPAD_MASK) == 0, "LPAD must be 8-aligned pow2"

# Weight-slab indices (one (128,128) bf16 matrix each).
N_W = 10
_IW_CONV1 = 0             # conv1 im2col weight (rows 0..55, lanes 0..31)
_IW_CONV2 = 1             # conv2 taps 1..3     (rows 0..31, lanes 0..63)
_IW_CONV3 = 4             # conv3 taps 4..6     (rows 0..63, lanes 0..127)
_IW_FC = 7                # fc weight, cnn half
_IW_HEAD1 = 8             # fused [actor_l1 | critic_l1]
_IW_HEAD2 = 9             # fused block-diagonal output layer

# Bias-slab rows.
_IB_C1, _IB_C2, _IB_C3, _IB_FC, _IB_H1, _IB_H2 = 0, 1, 2, 3, 4, 5


# -----------------------------------------------------------------------------
# Pallas kernel: whole forward pass on whole-array VMEM refs (no grid).
# -----------------------------------------------------------------------------
def _actor_critic_kernel(cols_ref, w_ref, bias_ref, posfc_ref, out_ref):
    f32 = jnp.float32
    bf16 = jnp.bfloat16
    n_rows = cols_ref.shape[0]            # B_pad * LPAD
    b_pad = n_rows // LPAD

    bias = bias_ref[...]                  # (8, 128) f32, one load

    def brow(i):
        return bias[i:i + 1, :]           # (1, 128) row, broadcast on add

    def shift_rows(h, t):
        # shifted[r] = h[r + t].  Rows wrapped from the top only land in the
        # last sample's pool-masked garbage rows, so a plain rotate is fine.
        if t == 0:
            return h
        return jnp.concatenate([h[t:, :], h[:t, :]], axis=0)

    def conv_taps(h, w_base, bias_idx, ntaps):
        # Valid conv as per-tap sublane-shifted MXU accumulation; channels stay
        # on lanes (no lane-axis concat), f32 accumulation, f32 activations.
        acc = jnp.zeros((n_rows, LANES), f32)
        for t in range(ntaps):
            ht = shift_rows(h, t).astype(bf16)
            acc += jnp.dot(ht, w_ref[w_base + t], preferred_element_type=f32)
        return jnp.maximum(acc + brow(bias_idx), 0.0)

    # conv1: im2col columns were built (lane-padded to 128, bf16) in the
    # wrapper; one (N,128)@(128,128) dot.  Output occupies lanes 0..31.
    h = jnp.maximum(
        jnp.dot(cols_ref[...], w_ref[_IW_CONV1], preferred_element_type=f32)
        + brow(_IB_C1), 0.0)
    h = conv_taps(h, _IW_CONV2, _IB_C2, K2)      # lanes 0..63 valid
    h = conv_taps(h, _IW_CONV3, _IB_C3, K3)      # lanes 0..127 valid

    # AdaptiveAvgPool1d(1) + Flatten: one (B, N)@(N, 128) MXU dot against an
    # iota-built selection matrix (picks the L3 valid rows of each sample and
    # masks the padded garbage rows), then an exact f32 scale by 1/L3.
    rsel = lax.broadcasted_iota(jnp.int32, (b_pad, n_rows), 0)
    csel = lax.broadcasted_iota(jnp.int32, (b_pad, n_rows), 1)
    valid = ((csel >> _LPAD_SHIFT) == rsel) & ((csel & _LPAD_MASK) < L3)
    pool = jnp.where(valid, 1.0, 0.0).astype(bf16)
    cnn_feat = jnp.dot(pool, h.astype(bf16),
                       preferred_element_type=f32) * (1.0 / L3)   # (B, 128)

    # fc: Linear(128+32, 128) + ReLU.  The embedding half was folded through fc
    # in the wrapper and arrives pre-gathered as a dense (B, 128) f32 addend.
    feat = jnp.maximum(
        jnp.dot(cnn_feat.astype(bf16), w_ref[_IW_FC],
                preferred_element_type=f32)
        + posfc_ref[...] + brow(_IB_FC), 0.0)

    # Fused actor/critic heads: hidden lanes 0..63 = actor, 64..127 = critic;
    # block-diagonal output: lanes 0..2 = logits, lane 3 = value, rest 0.
    hid = jnp.maximum(
        jnp.dot(feat.astype(bf16), w_ref[_IW_HEAD1],
                preferred_element_type=f32) + brow(_IB_H1), 0.0)
    raw = (jnp.dot(hid.astype(bf16), w_ref[_IW_HEAD2],
                   preferred_element_type=f32) + brow(_IB_H2))

    # Masked softmax over the first N_ACTIONS lanes; the value lane passes
    # through untouched.  Mask applied BEFORE exp (no overflow possible) and
    # the denominator uses an exact divide.
    lane = lax.broadcasted_iota(jnp.int32, raw.shape, 1)
    act_mask = lane < N_ACTIONS
    masked = jnp.where(act_mask, raw, -1e30)
    m = jnp.max(masked, axis=-1, keepdims=True)
    e = jnp.exp(masked - m)
    probs = e / jnp.sum(e, axis=-1, keepdims=True)
    out_ref[...] = jnp.where(act_mask, probs, raw).astype(out_ref.dtype)


# -----------------------------------------------------------------------------
# Parameters (nn.Module-shaped) and kernel-ready packing.
# -----------------------------------------------------------------------------
def make_params(key):
    """Deterministic synthetic parameters matching the nn.Module shapes.

    Conv weights are stored (K, Cin, Cout); import from PyTorch Conv1d
    (Cout, Cin, K) as w.transpose(2, 1, 0).  Linear weights are stored
    (in, out); import from PyTorch Linear (out, in) as w.T.
    """
    def lin(k, fan_in, shape):
        return (jax.random.normal(k, shape, jnp.float32)
                / jnp.sqrt(jnp.float32(fan_in)))

    ks = jax.random.split(key, 18)
    return dict(
        c1w=lin(ks[0], N_FEATURES * K1, (K1, N_FEATURES, C1)),
        c1b=0.1 * jax.random.normal(ks[9], (1, C1), jnp.float32),
        c2w=lin(ks[1], C1 * K2, (K2, C1, C2)),
        c2b=0.1 * jax.random.normal(ks[10], (1, C2), jnp.float32),
        c3w=lin(ks[2], C2 * K3, (K3, C2, C3)),
        c3b=0.1 * jax.random.normal(ks[11], (1, C3), jnp.float32),
        emb=jax.random.normal(ks[3], (3, EMB_DIM), jnp.float32),
        fcw=lin(ks[4], C3 + EMB_DIM, (C3 + EMB_DIM, FC_DIM)),
        fcb=0.1 * jax.random.normal(ks[12], (1, FC_DIM), jnp.float32),
        a1w=lin(ks[5], FC_DIM, (FC_DIM, HID)),
        a1b=0.1 * jax.random.normal(ks[13], (1, HID), jnp.float32),
        a2w=lin(ks[6], HID, (HID, N_ACTIONS)),
        a2b=0.1 * jax.random.normal(ks[14], (1, N_ACTIONS), jnp.float32),
        v1w=lin(ks[7], FC_DIM, (FC_DIM, HID)),
        v1b=0.1 * jax.random.normal(ks[15], (1, HID), jnp.float32),
        v2w=lin(ks[8], HID, (HID, 1)),
        v2b=0.1 * jax.random.normal(ks[16], (1, 1), jnp.float32),
    )


def pack_for_kernel(p):
    """One-time plain-JAX repack into two slabs + a folded embedding table.

    * wslab (10, 128, 128) bf16: every MXU operand, zero-padded to 128 lanes
      and 128 rows (im2col conv1, per-tap conv2/3, fc cnn half, fused heads).
    * bias  (8, 128) f32: one lane-padded row per layer bias (heads fused).
    * embfc (3, 128) f32: position embedding folded through fc's second half.
    """
    f32 = jnp.float32
    W = jnp.zeros((N_W, LANES, LANES), f32)
    W = W.at[_IW_CONV1, :K1 * N_FEATURES, :C1].set(
        p["c1w"].reshape(K1 * N_FEATURES, C1))
    for t in range(K2):
        W = W.at[_IW_CONV2 + t, :C1, :C2].set(p["c2w"][t])
    for t in range(K3):
        W = W.at[_IW_CONV3 + t, :C2, :C3].set(p["c3w"][t])
    W = W.at[_IW_FC].set(p["fcw"][:C3, :])
    W = W.at[_IW_HEAD1, :, :HID].set(p["a1w"])
    W = W.at[_IW_HEAD1, :, HID:].set(p["v1w"])
    W = W.at[_IW_HEAD2, :HID, :N_ACTIONS].set(p["a2w"])
    W = W.at[_IW_HEAD2, HID:, N_ACTIONS:N_ACTIONS + 1].set(p["v2w"])

    bias = jnp.zeros((8, LANES), f32)
    bias = bias.at[_IB_C1, :C1].set(p["c1b"][0])
    bias = bias.at[_IB_C2, :C2].set(p["c2b"][0])
    bias = bias.at[_IB_C3, :C3].set(p["c3b"][0])
    bias = bias.at[_IB_FC, :FC_DIM].set(p["fcb"][0])
    bias = bias.at[_IB_H1, :HID].set(p["a1b"][0])
    bias = bias.at[_IB_H1, HID:].set(p["v1b"][0])
    bias = bias.at[_IB_H2, :N_ACTIONS].set(p["a2b"][0])
    bias = bias.at[_IB_H2, N_ACTIONS:N_ACTIONS + 1].set(p["v2b"][0])

    embfc = jnp.dot(p["emb"], p["fcw"][C3:, :])            # (3, 128) f32
    return dict(wslab=W.astype(jnp.bfloat16), bias=bias, embfc=embfc)


# -----------------------------------------------------------------------------
# Wrapper
# -----------------------------------------------------------------------------
def _round_up(x, m):
    return ((x + m - 1) // m) * m


@jax.jit
def actor_critic_forward(packed, market_data, position):
    """market_data: (B, SEQ_LEN, N_FEATURES) f32, position: (B,) int32 in [0,3)."""
    b = market_data.shape[0]
    b_pad = _round_up(b, 8)                                 # sublane-align batch

    # Input layout prep (pure data movement, one fused XLA op):
    #  pad batch, hoist conv1's im2col (7 taps x 8 channels), keep LPAD=16
    #  rows/sample (8-aligned; rows >= L1 are finite garbage masked in-kernel),
    #  lane-pad 56 -> 128, cast to bf16 (MXU operand dtype).
    md = jnp.pad(market_data.astype(jnp.float32),
                 ((0, b_pad - b), (0, K1 - 1), (0, 0)))     # (b_pad, L+K1-1, F)
    cols = jnp.concatenate([md[:, t:t + LPAD, :] for t in range(K1)],
                           axis=-1)                         # (b_pad, 16, 56)
    cols = jnp.pad(cols, ((0, 0), (0, 0), (0, LANES - K1 * N_FEATURES)))
    cols = cols.reshape(b_pad * LPAD, LANES).astype(jnp.bfloat16)

    # Position embedding folded through fc; gathered here so the kernel gets a
    # dense (b_pad, 128) f32 addend instead of a 1-lane int operand.
    pos = jnp.pad(position.astype(jnp.int32), (0, b_pad - b))
    posfc = jnp.take(packed["embfc"], pos, axis=0)          # (b_pad, 128)

    vmem = pl.BlockSpec(memory_space=pltpu.MemorySpace.VMEM)
    # TODO(synk): for real training batches add grid=(b_pad // TB,) with
    # dimension_semantics=("parallel",) so v7x's two TensorCores split the
    # batch; at b_pad=8 a single grid point is optimal.
    out = pl.pallas_call(
        _actor_critic_kernel,
        out_shape=jax.ShapeDtypeStruct((b_pad, LANES), jnp.float32),
        in_specs=[vmem, vmem, vmem, vmem],
        out_specs=vmem,
    )(cols, packed["wslab"], packed["bias"], posfc)

    probs = out[:b, :N_ACTIONS]                             # (B, n_actions)
    value = out[:b, N_ACTIONS:N_ACTIONS + 1]                # (B, 1)
    # TODO(synk): torch.distributions.Categorical has no Pallas equivalent;
    # the kernel returns its parameterizing probabilities instead.
    return probs, value


# -----------------------------------------------------------------------------
# Pure-JAX f32 reference (mirrors the PyTorch module) for correctness checks.
# -----------------------------------------------------------------------------
def reference_forward(params, market_data, position):
    def conv1d_relu(h, w, bcol):                            # w: (K, Cin, Cout)
        k = w.shape[0]
        lout = h.shape[1] - k + 1
        acc = sum(jnp.einsum("blc,cd->bld", h[:, t:t + lout, :], w[t])
                  for t in range(k))
        return jax.nn.relu(acc + bcol)

    h = conv1d_relu(market_data, params["c1w"], params["c1b"])
    h = conv1d_relu(h, params["c2w"], params["c2b"])
    h = conv1d_relu(h, params["c3w"], params["c3b"])
    cnn_feat = jnp.mean(h, axis=1)                          # AdaptiveAvgPool1d(1)
    pos_feat = params["emb"][position]
    combined = jnp.concatenate([cnn_feat, pos_feat], axis=1)
    feat = jax.nn.relu(combined @ params["fcw"] + params["fcb"])
    logits = (jax.nn.relu(feat @ params["a1w"] + params["a1b"])
              @ params["a2w"] + params["a2b"])
    value = (jax.nn.relu(feat @ params["v1w"] + params["v1b"])
             @ params["v2w"] + params["v2b"])
    return jax.nn.softmax(logits, axis=-1), value


if __name__ == "__main__":
    key = jax.random.PRNGKey(0)
    kp, kx, kpos = jax.random.split(key, 3)

    params = make_params(kp)
    packed = pack_for_kernel(params)
    market_data = jax.random.normal(kx, (BATCH, SEQ_LEN, N_FEATURES),
                                    jnp.float32)
    position = jax.random.randint(kpos, (BATCH,), 0, 3, jnp.int32)

    probs, value = actor_critic_forward(packed, market_data, position)
    jax.block_until_ready((probs, value))

    assert probs.shape == (BATCH, N_ACTIONS)
    assert value.shape == (BATCH, 1)
    # Exact divide in the softmax -> probabilities sum to 1 to f32 precision.
    assert bool(jnp.all(jnp.abs(jnp.sum(probs, axis=-1) - 1.0) < 1e-3))

    # Compare against the pure-JAX f32 reference (kernel MXU operands are bf16,
    # so allow a small absolute tolerance).
    ref_probs, ref_value = reference_forward(params, market_data, position)
    assert bool(jnp.allclose(probs, ref_probs, atol=5e-2))
    assert bool(jnp.allclose(value, ref_value, atol=5e-2))

    print("KERNEL_OK")
</pallas_src>

<mosaic_0001>
module attributes {stable_mosaic.version = 11 : i64} {
  func.func @_actor_critic_kernel(%arg0: memref<128x128xbf16, #tpu.memory_space<vmem>>, %arg1: memref<10x128x128xbf16, #tpu.memory_space<vmem>>, %arg2: memref<8x128xf32, #tpu.memory_space<vmem>>, %arg3: memref<8x128xf32, #tpu.memory_space<vmem>>, %arg4: memref<8x128xf32, #tpu.memory_space<vmem>>) attributes {dimension_semantics = [], scalar_prefetch = 0 : i64, scratch_operands = 0 : i64, tpu.core_type = #tpu.core_type<tc>} {
    %c0 = arith.constant 0 : index
    %c0_0 = arith.constant 0 : index
    %0 = vector.load %arg2[%c0, %c0_0] : memref<8x128xf32, #tpu.memory_space<vmem>>, vector<8x128xf32>
    %c0_1 = arith.constant 0 : index
    %c0_2 = arith.constant 0 : index
    %1 = vector.load %arg0[%c0_1, %c0_2] : memref<128x128xbf16, #tpu.memory_space<vmem>>, vector<128x128xbf16>
    %c0_3 = arith.constant 0 : index
    %c0_4 = arith.constant 0 : index
    %c0_5 = arith.constant 0 : index
    %2 = vector.load %arg1[%c0_3, %c0_4, %c0_5] : memref<10x128x128xbf16, #tpu.memory_space<vmem>>, vector<1x128x128xbf16>
    %3 = vector.shape_cast %2 : vector<1x128x128xbf16> to vector<128x128xbf16>
    %cst = arith.constant dense<0.000000e+00> : vector<128x128xf32>
    %4 = tpu.matmul %1, %3, %cst {dimension_numbers = #tpu.dot_dimension_numbers<[1], [0], [0], [1], [0, 0, 1, 1], [], []>} : vector<128x128xbf16>, vector<128x128xbf16>, vector<128x128xf32> -> vector<128x128xf32>
    %5 = vector.extract_strided_slice %0 {offsets = [0, 0], sizes = [1, 128], strides = [1, 1]} : vector<8x128xf32> to vector<1x128xf32>
    %6 = vector.broadcast %5 : vector<1x128xf32> to vector<128x128xf32>
    %7 = arith.addf %4, %6 : vector<128x128xf32>
    %cst_6 = arith.constant 0.000000e+00 : f32
    %8 = vector.broadcast %cst_6 : f32 to vector<128x128xf32>
    %9 = arith.maximumf %7, %8 : vector<128x128xf32>
    %cst_7 = arith.constant 0.000000e+00 : f32
    %10 = vector.broadcast %cst_7 : f32 to vector<128x128xf32>
    %11 = arith.truncf %9 : vector<128x128xf32> to vector<128x128xbf16>
    %c1 = arith.constant 1 : index
    %c0_8 = arith.constant 0 : index
    %c0_9 = arith.constant 0 : index
    %12 = vector.load %arg1[%c1, %c0_8, %c0_9] : memref<10x128x128xbf16, #tpu.memory_space<vmem>>, vector<1x128x128xbf16>
    %13 = vector.shape_cast %12 : vector<1x128x128xbf16> to vector<128x128xbf16>
    %cst_10 = arith.constant dense<0.000000e+00> : vector<128x128xf32>
    %14 = tpu.matmul %11, %13, %cst_10 {dimension_numbers = #tpu.dot_dimension_numbers<[1], [0], [0], [1], [0, 0, 1, 1], [], []>} : vector<128x128xbf16>, vector<128x128xbf16>, vector<128x128xf32> -> vector<128x128xf32>
    %15 = arith.addf %10, %14 : vector<128x128xf32>
    %16 = vector.extract_strided_slice %9 {offsets = [1, 0], sizes = [127, 128], strides = [1, 1]} : vector<128x128xf32> to vector<127x128xf32>
    %17 = vector.extract_strided_slice %9 {offsets = [0, 0], sizes = [1, 128], strides = [1, 1]} : vector<128x128xf32> to vector<1x128xf32>
    %18 = tpu.concatenate %16, %17 in 0 : vector<127x128xf32>, vector<1x128xf32> -> vector<128x128xf32>
    %19 = arith.truncf %18 : vector<128x128xf32> to vector<128x128xbf16>
    %c2 = arith.constant 2 : index
    %c0_11 = arith.constant 0 : index
    %c0_12 = arith.constant 0 : index
    %20 = vector.load %arg1[%c2, %c0_11, %c0_12] : memref<10x128x128xbf16, #tpu.memory_space<vmem>>, vector<1x128x128xbf16>
    %21 = vector.shape_cast %20 : vector<1x128x128xbf16> to vector<128x128xbf16>
    %cst_13 = arith.constant dense<0.000000e+00> : vector<128x128xf32>
    %22 = tpu.matmul %19, %21, %cst_13 {dimension_numbers = #tpu.dot_dimension_numbers<[1], [0], [0], [1], [0, 0, 1, 1], [], []>} : vector<128x128xbf16>, vector<128x128xbf16>, vector<128x128xf32> -> vector<128x128xf32>
    %23 = arith.addf %15, %22 : vector<128x128xf32>
    %24 = vector.extract_strided_slice %9 {offsets = [2, 0], sizes = [126, 128], strides = [1, 1]} : vector<128x128xf32> to vector<126x128xf32>
    %25 = vector.extract_strided_slice %9 {offsets = [0, 0], sizes = [2, 128], strides = [1, 1]} : vector<128x128xf32> to vector<2x128xf32>
    %26 = tpu.concatenate %24, %25 in 0 : vector<126x128xf32>, vector<2x128xf32> -> vector<128x128xf32>
    %27 = arith.truncf %26 : vector<128x128xf32> to vector<128x128xbf16>
    %c3 = arith.constant 3 : index
    %c0_14 = arith.constant 0 : index
    %c0_15 = arith.constant 0 : index
    %28 = vector.load %arg1[%c3, %c0_14, %c0_15] : memref<10x128x128xbf16, #tpu.memory_space<vmem>>, vector<1x128x128xbf16>
    %29 = vector.shape_cast %28 : vector<1x128x128xbf16> to vector<128x128xbf16>
    %cst_16 = arith.constant dense<0.000000e+00> : vector<128x128xf32>
    %30 = tpu.matmul %27, %29, %cst_16 {dimension_numbers = #tpu.dot_dimension_numbers<[1], [0], [0], [1], [0, 0, 1, 1], [], []>} : vector<128x128xbf16>, vector<128x128xbf16>, vector<128x128xf32> -> vector<128x128xf32>
    %31 = arith.addf %23, %30 : vector<128x128xf32>
    %32 = vector.extract_strided_slice %0 {offsets = [1, 0], sizes = [1, 128], strides = [1, 1]} : vector<8x128xf32> to vector<1x128xf32>
    %33 = vector.broadcast %32 : vector<1x128xf32> to vector<128x128xf32>
    %34 = arith.addf %31, %33 : vector<128x128xf32>
    %cst_17 = arith.constant 0.000000e+00 : f32
    %35 = vector.broadcast %cst_17 : f32 to vector<128x128xf32>
    %36 = arith.maximumf %34, %35 : vector<128x128xf32>
    %cst_18 = arith.constant 0.000000e+00 : f32
    %37 = vector.broadcast %cst_18 : f32 to vector<128x128xf32>
    %38 = arith.truncf %36 : vector<128x128xf32> to vector<128x128xbf16>
    %c4 = arith.constant 4 : index
    %c0_19 = arith.constant 0 : index
    %c0_20 = arith.constant 0 : index
    %39 = vector.load %arg1[%c4, %c0_19, %c0_20] : memref<10x128x128xbf16, #tpu.memory_space<vmem>>, vector<1x128x128xbf16>
    %40 = vector.shape_cast %39 : vector<1x128x128xbf16> to vector<128x128xbf16>
    %cst_21 = arith.constant dense<0.000000e+00> : vector<128x128xf32>
    %41 = tpu.matmul %38, %40, %cst_21 {dimension_numbers = #tpu.dot_dimension_numbers<[1], [0], [0], [1], [0, 0, 1, 1], [], []>} : vector<128x128xbf16>, vector<128x128xbf16>, vector<128x128xf32> -> vector<128x128xf32>
    %42 = arith.addf %37, %41 : vector<128x128xf32>
    %43 = vector.extract_strided_slice %36 {offsets = [1, 0], sizes = [127, 128], strides = [1, 1]} : vector<128x128xf32> to vector<127x128xf32>
    %44 = vector.extract_strided_slice %36 {offsets = [0, 0], sizes = [1, 128], strides = [1, 1]} : vector<128x128xf32> to vector<1x128xf32>
    %45 = tpu.concatenate %43, %44 in 0 : vector<127x128xf32>, vector<1x128xf32> -> vector<128x128xf32>
    %46 = arith.truncf %45 : vector<128x128xf32> to vector<128x128xbf16>
    %c5 = arith.constant 5 : index
    %c0_22 = arith.constant 0 : index
    %c0_23 = arith.constant 0 : index
    %47 = vector.load %arg1[%c5, %c0_22, %c0_23] : memref<10x128x128xbf16, #tpu.memory_space<vmem>>, vector<1x128x128xbf16>
    %48 = vector.shape_cast %47 : vector<1x128x128xbf16> to vector<128x128xbf16>
    %cst_24 = arith.constant dense<0.000000e+00> : vector<128x128xf32>
    %49 = tpu.matmul %46, %48, %cst_24 {dimension_numbers = #tpu.dot_dimension_numbers<[1], [0], [0], [1], [0, 0, 1, 1], [], []>} : vector<128x128xbf16>, vector<128x128xbf16>, vector<128x128xf32> -> vector<128x128xf32>
    %50 = arith.addf %42, %49 : vector<128x128xf32>
    %51 = vector.extract_strided_slice %36 {offsets = [2, 0], sizes = [126, 128], strides = [1, 1]} : vector<128x128xf32> to vector<126x128xf32>
    %52 = vector.extract_strided_slice %36 {offsets = [0, 0], sizes = [2, 128], strides = [1, 1]} : vector<128x128xf32> to vector<2x128xf32>
    %53 = tpu.concatenate %51, %52 in 0 : vector<126x128xf32>, vector<2x128xf32> -> vector<128x128xf32>
    %54 = arith.truncf %53 : vector<128x128xf32> to vector<128x128xbf16>
    %c6 = arith.constant 6 : index
    %c0_25 = arith.constant 0 : index
    %c0_26 = arith.constant 0 : index
    %55 = vector.load %arg1[%c6, %c0_25, %c0_26] : memref<10x128x128xbf16, #tpu.memory_space<vmem>>, vector<1x128x128xbf16>
    %56 = vector.shape_cast %55 : vector<1x128x128xbf16> to vector<128x128xbf16>
    %cst_27 = arith.constant dense<0.000000e+00> : vector<128x128xf32>
    %57 = tpu.matmul %54, %56, %cst_27 {dimension_numbers = #tpu.dot_dimension_numbers<[1], [0], [0], [1], [0, 0, 1, 1], [], []>} : vector<128x128xbf16>, vector<128x128xbf16>, vector<128x128xf32> -> vector<128x128xf32>
    %58 = arith.addf %50, %57 : vector<128x128xf32>
    %59 = vector.extract_strided_slice %0 {offsets = [2, 0], sizes = [1, 128], strides = [1, 1]} : vector<8x128xf32> to vector<1x128xf32>
    %60 = vector.broadcast %59 : vector<1x128xf32> to vector<128x128xf32>
    %61 = arith.addf %58, %60 : vector<128x128xf32>
    %cst_28 = arith.constant 0.000000e+00 : f32
    %62 = vector.broadcast %cst_28 : f32 to vector<128x128xf32>
    %63 = arith.maximumf %61, %62 : vector<128x128xf32>
    %64 = tpu.iota {dimensions = array<i32: 0>} : vector<8x128xi32>
    %65 = tpu.iota {dimensions = array<i32: 1>} : vector<8x128xi32>
    %c4_i32 = arith.constant 4 : i32
    %66 = vector.broadcast %c4_i32 : i32 to vector<8x128xi32>
    %67 = arith.shrsi %65, %66 : vector<8x128xi32>
    %68 = arith.cmpi eq, %67, %64 : vector<8x128xi32>
    %c15_i32 = arith.constant 15 : i32
    %69 = vector.broadcast %c15_i32 : i32 to vector<8x128xi32>
    %70 = arith.andi %65, %69 : vector<8x128xi32>
    %c6_i32 = arith.constant 6 : i32
    %71 = vector.broadcast %c6_i32 : i32 to vector<8x128xi32>
    %72 = arith.cmpi slt, %70, %71 : vector<8x128xi32>
    %73 = arith.andi %68, %72 : vector<8x128xi1>
    %cst_29 = arith.constant 1.000000e+00 : f32
    %cst_30 = arith.constant 0.000000e+00 : f32
    %74 = vector.broadcast %cst_29 : f32 to vector<8x128xf32>
    %75 = vector.broadcast %cst_30 : f32 to vector<8x128xf32>
    %76 = arith.select %73, %74, %75 : vector<8x128xi1>, vector<8x128xf32>
    %77 = arith.truncf %76 : vector<8x128xf32> to vector<8x128xbf16>
    %78 = arith.truncf %63 : vector<128x128xf32> to vector<128x128xbf16>
    %cst_31 = arith.constant dense<0.000000e+00> : vector<8x128xf32>
    %79 = tpu.matmul %77, %78, %cst_31 {dimension_numbers = #tpu.dot_dimension_numbers<[1], [0], [0], [1], [0, 0, 1, 1], [], []>} : vector<8x128xbf16>, vector<128x128xbf16>, vector<8x128xf32> -> vector<8x128xf32>
    %cst_32 = arith.constant 0.166666672 : f32
    %80 = vector.broadcast %cst_32 : f32 to vector<8x128xf32>
    %81 = arith.mulf %79, %80 : vector<8x128xf32>
    %82 = arith.truncf %81 : vector<8x128xf32> to vector<8x128xbf16>
    %c7 = arith.constant 7 : index
    %c0_33 = arith.constant 0 : index
    %c0_34 = arith.constant 0 : index
    %83 = vector.load %arg1[%c7, %c0_33, %c0_34] : memref<10x128x128xbf16, #tpu.memory_space<vmem>>, vector<1x128x128xbf16>
    %84 = vector.shape_cast %83 : vector<1x128x128xbf16> to vector<128x128xbf16>
    %cst_35 = arith.constant dense<0.000000e+00> : vector<8x128xf32>
    %85 = tpu.matmul %82, %84, %cst_35 {dimension_numbers = #tpu.dot_dimension_numbers<[1], [0], [0], [1], [0, 0, 1, 1], [], []>} : vector<8x128xbf16>, vector<128x128xbf16>, vector<8x128xf32> -> vector<8x128xf32>
    %c0_36 = arith.constant 0 : index
    %c0_37 = arith.constant 0 : index
    %86 = vector.load %arg3[%c0_36, %c0_37] : memref<8x128xf32, #tpu.memory_space<vmem>>, vector<8x128xf32>
    %87 = arith.addf %85, %86 : vector<8x128xf32>
    %88 = vector.extract_strided_slice %0 {offsets = [3, 0], sizes = [1, 128], strides = [1, 1]} : vector<8x128xf32> to vector<1x128xf32>
    %89 = vector.broadcast %88 : vector<1x128xf32> to vector<8x128xf32>
    %90 = arith.addf %87, %89 : vector<8x128xf32>
    %cst_38 = arith.constant 0.000000e+00 : f32
    %91 = vector.broadcast %cst_38 : f32 to vector<8x128xf32>
    %92 = arith.maximumf %90, %91 : vector<8x128xf32>
    %93 = arith.truncf %92 : vector<8x128xf32> to vector<8x128xbf16>
    %c8 = arith.constant 8 : index
    %c0_39 = arith.constant 0 : index
    %c0_40 = arith.constant 0 : index
    %94 = vector.load %arg1[%c8, %c0_39, %c0_40] : memref<10x128x128xbf16, #tpu.memory_space<vmem>>, vector<1x128x128xbf16>
    %95 = vector.shape_cast %94 : vector<1x128x128xbf16> to vector<128x128xbf16>
    %cst_41 = arith.constant dense<0.000000e+00> : vector<8x128xf32>
    %96 = tpu.matmul %93, %95, %cst_41 {dimension_numbers = #tpu.dot_dimension_numbers<[1], [0], [0], [1], [0, 0, 1, 1], [], []>} : vector<8x128xbf16>, vector<128x128xbf16>, vector<8x128xf32> -> vector<8x128xf32>
    %97 = vector.extract_strided_slice %0 {offsets = [4, 0], sizes = [1, 128], strides = [1, 1]} : vector<8x128xf32> to vector<1x128xf32>
    %98 = vector.broadcast %97 : vector<1x128xf32> to vector<8x128xf32>
    %99 = arith.addf %96, %98 : vector<8x128xf32>
    %cst_42 = arith.constant 0.000000e+00 : f32
    %100 = vector.broadcast %cst_42 : f32 to vector<8x128xf32>
    %101 = arith.maximumf %99, %100 : vector<8x128xf32>
    %102 = arith.truncf %101 : vector<8x128xf32> to vector<8x128xbf16>
    %c9 = arith.constant 9 : index
    %c0_43 = arith.constant 0 : index
    %c0_44 = arith.constant 0 : index
    %103 = vector.load %arg1[%c9, %c0_43, %c0_44] : memref<10x128x128xbf16, #tpu.memory_space<vmem>>, vector<1x128x128xbf16>
    %104 = vector.shape_cast %103 : vector<1x128x128xbf16> to vector<128x128xbf16>
    %cst_45 = arith.constant dense<0.000000e+00> : vector<8x128xf32>
    %105 = tpu.matmul %102, %104, %cst_45 {dimension_numbers = #tpu.dot_dimension_numbers<[1], [0], [0], [1], [0, 0, 1, 1], [], []>} : vector<8x128xbf16>, vector<128x128xbf16>, vector<8x128xf32> -> vector<8x128xf32>
    %106 = vector.extract_strided_slice %0 {offsets = [5, 0], sizes = [1, 128], strides = [1, 1]} : vector<8x128xf32> to vector<1x128xf32>
    %107 = vector.broadcast %106 : vector<1x128xf32> to vector<8x128xf32>
    %108 = arith.addf %105, %107 : vector<8x128xf32>
    %109 = tpu.iota {dimensions = array<i32: 1>} : vector<8x128xi32>
    %c3_i32 = arith.constant 3 : i32
    %110 = vector.broadcast %c3_i32 : i32 to vector<8x128xi32>
    %111 = arith.cmpi slt, %109, %110 : vector<8x128xi32>
    %cst_46 = arith.constant -1.000000e+30 : f32
    %112 = vector.broadcast %cst_46 : f32 to vector<8x128xf32>
    %113 = arith.select %111, %108, %112 : vector<8x128xi1>, vector<8x128xf32>
    %cst_47 = arith.constant dense<0xFF800000> : vector<8xf32>
    %114 = vector.multi_reduction <maximumf>, %113, %cst_47 [1] : vector<8x128xf32> to vector<8xf32>
    %115 = vector.shape_cast %114 : vector<8xf32> to vector<8x1xf32>
    %116 = vector.broadcast %115 : vector<8x1xf32> to vector<8x128xf32>
    %117 = arith.subf %113, %116 : vector<8x128xf32>
    %118 = math.exp %117 : vector<8x128xf32>
    %cst_48 = arith.constant dense<0.000000e+00> : vector<8xf32>
    %119 = vector.multi_reduction <add>, %118, %cst_48 [1] : vector<8x128xf32> to vector<8xf32>
    %120 = vector.shape_cast %119 : vector<8xf32> to vector<8x1xf32>
    %121 = vector.broadcast %120 : vector<8x1xf32> to vector<8x128xf32>
    %122 = arith.divf %118, %121 : vector<8x128xf32>
    %123 = arith.select %111, %122, %108 : vector<8x128xi1>, vector<8x128xf32>
    %c0_49 = arith.constant 0 : index
    %c0_50 = arith.constant 0 : index
    %124 = vector.load %arg4[%c0_49, %c0_50] : memref<8x128xf32, #tpu.memory_space<vmem>>, vector<8x128xf32>
    tpu.vector_store %arg4[%c0_49, %c0_50], %123 {strides = array<i32>} : memref<8x128xf32, #tpu.memory_space<vmem>>, vector<8x128xf32>,
    return
  }
}

</mosaic_0001>

<llo_original>
// kernel: actor_critic_forward.1
$region0: #{actor_critic_forward.1}
  #allocation0 [shape = 'u32[]', space=smem, size = 0x4, offset = 0x4, fixed_abs, tag = 'smem constant byte address 0x4 - core index']
  #allocation1 [shape = 'u32[144,128]{1,0:T(1,128)}', space=vmem, size = 0x12000, scoped, tag = 'internal scratch']
  %s0 = inlined_call_operand.vmem [shape: bf16[128,128], index: 0, kind: input, shape index: {}]
  %s1 = inlined_call_operand.vmem [shape: bf16[10,128,128], index: 1, kind: input, shape index: {}]
  %s2 = inlined_call_operand.vmem [shape: f32[8,128], index: 2, kind: input, shape index: {}]
  %s3 = inlined_call_operand.vmem [shape: f32[8,128], index: 3, kind: input, shape index: {}]
  %s4 = inlined_call_operand.vmem [shape: f32[8,128], index: 4, kind: output, shape index: {}]
  %s5 = sld [smem:[#allocation0]]
  $region26: #{actor_critic_forward.1} parent=0
    _
  %s7 = ssub.s32 1, %s5
  %s8 = scalar_select 0, %s7, %s5
  // Predicated region
  $region2: #{actor_critic_forward.1} parent=0 // pred_check
    _
  $region3: #{actor_critic_forward.1} parent=0 // pred_check_branch
    %10 = sbr.rel (0) target = $region5
  $region4: #{actor_critic_forward.1} parent=0 // pred_region
    _
  $region5: #{actor_critic_forward.1} parent=0 // pred_fallthru
    _
  // Predicated region
  $region6: #{actor_critic_forward.1} parent=0 // pred_check
    _
  $region7: #{actor_critic_forward.1} parent=0 // pred_check_branch
    %12 = sbr.rel (0) target = $region9
  $region8: #{actor_critic_forward.1} parent=0 // pred_region
    _
  $region9: #{actor_critic_forward.1} parent=0 // pred_fallthru
    _
  // Predicated region
  $region10: #{actor_critic_forward.1} parent=0 // pred_check
    _
  $region11: #{actor_critic_forward.1} parent=0 // pred_check_branch
    %14 = sbr.rel (0) target = $region13
  $region12: #{actor_critic_forward.1} parent=0 // pred_region
    _
  $region13: #{actor_critic_forward.1} parent=0 // pred_fallthru
    _
  // Predicated region
  $region14: #{actor_critic_forward.1} parent=0 // pred_check
    _
  $region15: #{actor_critic_forward.1} parent=0 // pred_check_branch
    %16 = sbr.rel (0) target = $region17
  $region16: #{actor_critic_forward.1} parent=0 // pred_region
    _
  $region17: #{actor_critic_forward.1} parent=0 // pred_fallthru
    _
  %v18 = vld [vmem:[%s2] sm:$0xff]
  %v19 = vld [vmem:[%s0] sm:$0xf]
  %v20 = vld [vmem:[%s0 + $0x4] sm:$0xf]
  %v21 = vld [vmem:[%s0 + $0x8] sm:$0xf]
  %v22 = vld [vmem:[%s0 + $0xc] sm:$0xf]
  %v23 = vld [vmem:[%s0 + $0x10] sm:$0xf]
  %v24 = vld [vmem:[%s0 + $0x14] sm:$0xf]
  %v25 = vld [vmem:[%s0 + $0x18] sm:$0xf]
  %v26 = vld [vmem:[%s0 + $0x1c] sm:$0xf]
  %v27 = vld [vmem:[%s0 + $0x20] sm:$0xf]
  %v28 = vld [vmem:[%s0 + $0x24] sm:$0xf]
  %v29 = vld [vmem:[%s0 + $0x28] sm:$0xf]
  %v30 = vld [vmem:[%s0 + $0x2c] sm:$0xf]
  %v31 = vld [vmem:[%s0 + $0x30] sm:$0xf]
  %v32 = vld [vmem:[%s0 + $0x34] sm:$0xf]
  %v33 = vld [vmem:[%s0 + $0x38] sm:$0xf]
  %v34 = vld [vmem:[%s0 + $0x3c] sm:$0xf]
  %v35 = vld [vmem:[%s1] sm:$0xf]
  %v36 = vld [vmem:[%s1 + $0x4] sm:$0xf]
  %v37 = vld [vmem:[%s1 + $0x8] sm:$0xf]
  %v38 = vld [vmem:[%s1 + $0xc] sm:$0xf]
  %v39 = vld [vmem:[%s1 + $0x10] sm:$0xf]
  %v40 = vld [vmem:[%s1 + $0x14] sm:$0xf]
  %v41 = vld [vmem:[%s1 + $0x18] sm:$0xf]
  %v42 = vld [vmem:[%s1 + $0x1c] sm:$0xf]
  %v43 = vld [vmem:[%s1 + $0x20] sm:$0xf]
  %v44 = vld [vmem:[%s1 + $0x24] sm:$0xf]
  %v45 = vld [vmem:[%s1 + $0x28] sm:$0xf]
  %v46 = vld [vmem:[%s1 + $0x2c] sm:$0xf]
  %v47 = vld [vmem:[%s1 + $0x30] sm:$0xf]
  %v48 = vld [vmem:[%s1 + $0x34] sm:$0xf]
  %v49 = vld [vmem:[%s1 + $0x38] sm:$0xf]
  %v50 = vld [vmem:[%s1 + $0x3c] sm:$0xf]
  %v51 = vlaneseq
  %v52 = vshrl.u32 %v51, 7
  %v53 = vsub.s32 0, %v52
  %v54 = vrot.slane %v18, %v53
  %v71 = vunpack.c.l.b16 %v19
  %v72 = vunpack.c.l.b16 %v20
  %v73 = vunpack.c.l.b16 %v21
  %v74 = vunpack.c.l.b16 %v22
  %v75 = vunpack.c.l.b16 %v23
  %v76 = vunpack.c.l.b16 %v24
  %v77 = vunpack.c.l.b16 %v25
  %v78 = vunpack.c.l.b16 %v26
  %v79 = vunpack.c.l.b16 %v27
  %v80 = vunpack.c.l.b16 %v28
  %v81 = vunpack.c.l.b16 %v29
  %v82 = vunpack.c.l.b16 %v30
  %v83 = vunpack.c.l.b16 %v31
  %v84 = vunpack.c.l.b16 %v32
  %v85 = vunpack.c.l.b16 %v33
  %v86 = vunpack.c.l.b16 %v34
  %v87 = vpack.c.b16 %v72, %v71
  %v88 = vpack.c.b16 %v74, %v73
  %v89 = vpack.c.b16 %v76, %v75
  %v90 = vpack.c.b16 %v78, %v77
  %v91 = vpack.c.b16 %v80, %v79
  %v92 = vpack.c.b16 %v82, %v81
  %v93 = vpack.c.b16 %v84, %v83
  %v94 = vpack.c.b16 %v86, %v85
  %v119 = vunpack.c.l.b16 %v35
  %v120 = vunpack.c.l.b16 %v36
  %v121 = vunpack.c.l.b16 %v37
  %v122 = vunpack.c.l.b16 %v38
  %v123 = vunpack.c.l.b16 %v39
  %v124 = vunpack.c.l.b16 %v40
  %v125 = vunpack.c.l.b16 %v41
  %v126 = vunpack.c.l.b16 %v42
  %v127 = vunpack.c.l.b16 %v43
  %v128 = vunpack.c.l.b16 %v44
  %v129 = vunpack.c.l.b16 %v45
  %v130 = vunpack.c.l.b16 %v46
  %v131 = vunpack.c.l.b16 %v47
  %v132 = vunpack.c.l.b16 %v48
  %v133 = vunpack.c.l.b16 %v49
  %v134 = vunpack.c.l.b16 %v50
  %v135 = vpack.c.b16 %v120, %v119
  %v136 = vpack.c.b16 %v122, %v121
  %v137 = vpack.c.b16 %v124, %v123
  %v138 = vpack.c.b16 %v126, %v125
  %v139 = vpack.c.b16 %v128, %v127
  %v140 = vpack.c.b16 %v130, %v129
  %v141 = vpack.c.b16 %v132, %v131
  %v142 = vpack.c.b16 %v134, %v133
  %151 = vmatprep.subr.bf16.mxu0 0
  %152 = vmatpush1.bf16.msra.mxu0 %v142
  %153 = vmatprep.subr.bf16.mxu0 0
  %154 = vmatpush1.bf16.msra.mxu0 %v141
  %155 = vmatprep.subr.bf16.mxu0 0
  %156 = vmatpush1.bf16.msra.mxu0 %v140
  %157 = vmatprep.subr.bf16.mxu0 0
  %158 = vmatpush1.bf16.msra.mxu0 %v139
  %159 = vmatprep.subr.bf16.mxu0 0
  %160 = vmatpush1.bf16.msra.mxu0 %v138
  %161 = vmatprep.subr.bf16.mxu0 0
  %162 = vmatpush1.bf16.msra.mxu0 %v137
  %163 = vmatprep.subr.bf16.mxu0 0
  %164 = vmatpush1.bf16.msra.mxu0 %v136
  %165 = vmatprep.subr.bf16.mxu0 0
  %166 = vmatpush1.bf16.msra.mxu0 %v135
  %167 = vmatprep.subr.bf16.mxu0 0
  %168 = vmatpush2.bf16.msra.mxu0 0
  %169 = vmatprep.subr.bf16.mxu0 0
  %170 = vmatpush2.bf16.msra.mxu0 0
  %171 = vmatprep.subr.bf16.mxu0 0
  %172 = vmatpush2.bf16.msra.mxu0 0
  %173 = vmatprep.subr.bf16.mxu0 0
  %174 = vmatpush2.bf16.msra.mxu0 0
  %175 = vmatprep.subr.bf16.mxu0 0
  %176 = vmatpush2.bf16.msra.mxu0 0
  %177 = vmatprep.subr.bf16.mxu0 0
  %178 = vmatpush2.bf16.msra.mxu0 0
  %179 = vmatprep.subr.bf16.mxu0 0
  %180 = vmatpush2.bf16.msra.mxu0 0
  %181 = vmatprep.subr.bf16.mxu0 0
  %182 = vmatpush2.bf16.msra.mxu0 0
  %183 = vmatprep.mubr.bf16.mxu0 0
  %184 = vmatmul.mubr.bf16.gmra.mxu0 %v87
  %v185 = vpop.f32.mrf.mxu0
  %v186 = vadd.f32 %v54, %v185
  %v187 = vpop.f32.mrf.mxu0
  %v188 = vpop.f32.mrf.mxu0
  %v189 = vadd.f32 %v54, %v188
  %v190 = vpop.f32.mrf.mxu0
  %191 = vmatprep.mubr.bf16.mxu0 0
  %192 = vmatmul.mubr.bf16.gmra.mxu0 %v88
  %v193 = vpop.f32.mrf.mxu0
  %v194 = vadd.f32 %v54, %v193
  %v195 = vpop.f32.mrf.mxu0
  %v196 = vpop.f32.mrf.mxu0
  %v197 = vadd.f32 %v54, %v196
  %v198 = vpop.f32.mrf.mxu0
  %199 = vmatprep.mubr.bf16.mxu0 0
  %200 = vmatmul.mubr.bf16.gmra.mxu0 %v89
  %v201 = vpop.f32.mrf.mxu0
  %v202 = vadd.f32 %v54, %v201
  %v203 = vpop.f32.mrf.mxu0
  %v204 = vpop.f32.mrf.mxu0
  %v205 = vadd.f32 %v54, %v204
  %v206 = vpop.f32.mrf.mxu0
  %207 = vmatprep.mubr.bf16.mxu0 0
  %208 = vmatmul.mubr.bf16.gmra.mxu0 %v90
  %v209 = vpop.f32.mrf.mxu0
  %v210 = vadd.f32 %v54, %v209
  %v211 = vpop.f32.mrf.mxu0
  %v212 = vpop.f32.mrf.mxu0
  %v213 = vadd.f32 %v54, %v212
  %v214 = vpop.f32.mrf.mxu0
  %215 = vmatprep.mubr.bf16.mxu0 0
  %216 = vmatmul.mubr.bf16.gmra.mxu0 %v91
  %v217 = vpop.f32.mrf.mxu0
  %v218 = vadd.f32 %v54, %v217
  %v219 = vpop.f32.mrf.mxu0
  %v220 = vpop.f32.mrf.mxu0
  %v221 = vadd.f32 %v54, %v220
  %v222 = vpop.f32.mrf.mxu0
  %223 = vmatprep.mubr.bf16.mxu0 0
  %224 = vmatmul.mubr.bf16.gmra.mxu0 %v92
  %v225 = vpop.f32.mrf.mxu0
  %v226 = vadd.f32 %v54, %v225
  %v227 = vpop.f32.mrf.mxu0
  %v228 = vpop.f32.mrf.mxu0
  %v229 = vadd.f32 %v54, %v228
  %v230 = vpop.f32.mrf.mxu0
  %231 = vmatprep.mubr.bf16.mxu0 0
  %232 = vmatmul.mubr.bf16.gmra.mxu0 %v93
  %v233 = vpop.f32.mrf.mxu0
  %v234 = vadd.f32 %v54, %v233
  %v235 = vpop.f32.mrf.mxu0
  %v236 = vpop.f32.mrf.mxu0
  %v237 = vadd.f32 %v54, %v236
  %v238 = vpop.f32.mrf.mxu0
  %239 = vmatprep.mubr.bf16.mxu0 0
  %240 = vmatmul.mubr.bf16.gmra.mxu0 %v94
  %v241 = vpop.f32.mrf.mxu0
  %v242 = vadd.f32 %v54, %v241
  %v243 = vpop.f32.mrf.mxu0
  %v244 = vpop.f32.mrf.mxu0
  %v245 = vadd.f32 %v54, %v244
  %v246 = vpop.f32.mrf.mxu0
  %247 = vdwg.mxu0
  %v248 = vmax.f32 %v186, 0.0
  %v249 = vmax.f32 %v189, 0.0
  %v250 = vmax.f32 %v194, 0.0
  %v251 = vmax.f32 %v197, 0.0
  %v252 = vmax.f32 %v202, 0.0
  %v253 = vmax.f32 %v205, 0.0
  %v254 = vmax.f32 %v210, 0.0
  %v255 = vmax.f32 %v213, 0.0
  %v256 = vmax.f32 %v218, 0.0
  %v257 = vmax.f32 %v221, 0.0
  %v258 = vmax.f32 %v226, 0.0
  %v259 = vmax.f32 %v229, 0.0
  %v260 = vmax.f32 %v234, 0.0
  %v261 = vmax.f32 %v237, 0.0
  %v262 = vmax.f32 %v242, 0.0
  %v263 = vmax.f32 %v245, 0.0
  %v264 = vpack.c.bf16 %v249, %v248
  %v265 = vpack.c.bf16 %v251, %v250
  %v266 = vpack.c.bf16 %v253, %v252
  %v267 = vpack.c.bf16 %v255, %v254
  %v268 = vpack.c.bf16 %v257, %v256
  %v269 = vpack.c.bf16 %v259, %v258
  %v270 = vpack.c.bf16 %v261, %v260
  %v271 = vpack.c.bf16 %v263, %v262
  %s272 = scalar_lea.vmem %s1, 64
  %v273 = vld [vmem:[%s272] sm:$0xf]
  %v274 = vld [vmem:[%s272 + $0x4] sm:$0xf]
  %v275 = vld [vmem:[%s272 + $0x8] sm:$0xf]
  %v276 = vld [vmem:[%s272 + $0xc] sm:$0xf]
  %v277 = vld [vmem:[%s272 + $0x10] sm:$0xf]
  %v278 = vld [vmem:[%s272 + $0x14] sm:$0xf]
  %v279 = vld [vmem:[%s272 + $0x18] sm:$0xf]
  %v280 = vld [vmem:[%s272 + $0x1c] sm:$0xf]
  %v281 = vld [vmem:[%s272 + $0x20] sm:$0xf]
  %v282 = vld [vmem:[%s272 + $0x24] sm:$0xf]
  %v283 = vld [vmem:[%s272 + $0x28] sm:$0xf]
  %v284 = vld [vmem:[%s272 + $0x2c] sm:$0xf]
  %v285 = vld [vmem:[%s272 + $0x30] sm:$0xf]
  %v286 = vld [vmem:[%s272 + $0x34] sm:$0xf]
  %v287 = vld [vmem:[%s272 + $0x38] sm:$0xf]
  %v288 = vld [vmem:[%s272 + $0x3c] sm:$0xf]
  %vm305 = vcmask 1046528
  %v306 = vrot.slane %v248, 1
  %v307 = vrot.slane %v249, 1
  %v308 = vsel %vm305, %v306, %v307
  %v309 = vrot.slane %v250, 1
  %v310 = vsel %vm305, %v307, %v309
  %v311 = vrot.slane %v251, 1
  %v312 = vsel %vm305, %v309, %v311
  %v313 = vrot.slane %v252, 1
  %v314 = vsel %vm305, %v311, %v313
  %v315 = vrot.slane %v253, 1
  %v316 = vsel %vm305, %v313, %v315
  %v317 = vrot.slane %v254, 1
  %v318 = vsel %vm305, %v315, %v317
  %v319 = vrot.slane %v255, 1
  %v320 = vsel %vm305, %v317, %v319
  %v321 = vrot.slane %v256, 1
  %v322 = vsel %vm305, %v319, %v321
  %v323 = vrot.slane %v257, 1
  %v324 = vsel %vm305, %v321, %v323
  %v325 = vrot.slane %v258, 1
  %v326 = vsel %vm305, %v323, %v325
  %v327 = vrot.slane %v259, 1
  %v328 = vsel %vm305, %v325, %v327
  %v329 = vrot.slane %v260, 1
  %v330 = vsel %vm305, %v327, %v329
  %v331 = vrot.slane %v261, 1
  %v332 = vsel %vm305, %v329, %v331
  %v333 = vrot.slane %v262, 1
  %v334 = vsel %vm305, %v331, %v333
  %v335 = vrot.slane %v263, 1
  %v336 = vsel %vm305, %v333, %v335
  %v354 = vsel %vm305, %v335, %v306
  %v355 = vpack.c.bf16 %v310, %v308
  %v356 = vpack.c.bf16 %v314, %v312
  %v357 = vpack.c.bf16 %v318, %v316
  %v358 = vpack.c.bf16 %v322, %v320
  %v359 = vpack.c.bf16 %v326, %v324
  %v360 = vpack.c.bf16 %v330, %v328
  %v361 = vpack.c.bf16 %v334, %v332
  %v362 = vpack.c.bf16 %v354, %v336
  %s363 = scalar_lea.vmem %s1, 128
  %v364 = vld [vmem:[%s363] sm:$0xf]
  %v365 = vld [vmem:[%s363 + $0x4] sm:$0xf]
  %v366 = vld [vmem:[%s363 + $0x8] sm:$0xf]
  %v367 = vld [vmem:[%s363 + $0xc] sm:$0xf]
  %v368 = vld [vmem:[%s363 + $0x10] sm:$0xf]
  %v369 = vld [vmem:[%s363 + $0x14] sm:$0xf]
  %v370 = vld [vmem:[%s363 + $0x18] sm:$0xf]
  %v371 = vld [vmem:[%s363 + $0x1c] sm:$0xf]
  %v372 = vld [vmem:[%s363 + $0x20] sm:$0xf]
  %v373 = vld [vmem:[%s363 + $0x24] sm:$0xf]
  %v374 = vld [vmem:[%s363 + $0x28] sm:$0xf]
  %v375 = vld [vmem:[%s363 + $0x2c] sm:$0xf]
  %v376 = vld [vmem:[%s363 + $0x30] sm:$0xf]
  %v377 = vld [vmem:[%s363 + $0x34] sm:$0xf]
  %v378 = vld [vmem:[%s363 + $0x38] sm:$0xf]
  %v379 = vld [vmem:[%s363 + $0x3c] sm:$0xf]
  %v396 = vunpack.c.l.b16 %v364
  %v397 = vunpack.c.l.b16 %v365
  %v398 = vunpack.c.l.b16 %v366
  %v399 = vunpack.c.l.b16 %v367
  %v400 = vunpack.c.l.b16 %v368
  %v401 = vunpack.c.l.b16 %v369
  %v402 = vunpack.c.l.b16 %v370
  %v403 = vunpack.c.l.b16 %v371
  %v404 = vunpack.c.l.b16 %v372
  %v405 = vunpack.c.l.b16 %v373
  %v406 = vunpack.c.l.b16 %v374
  %v407 = vunpack.c.l.b16 %v375
  %v408 = vunpack.c.l.b16 %v376
  %v409 = vunpack.c.l.b16 %v377
  %v410 = vunpack.c.l.b16 %v378
  %v411 = vunpack.c.l.b16 %v379
  %v412 = vpack.c.b16 %v397, %v396
  %v413 = vpack.c.b16 %v399, %v398
  %v414 = vpack.c.b16 %v401, %v400
  %v415 = vpack.c.b16 %v403, %v402
  %v416 = vpack.c.b16 %v405, %v404
  %v417 = vpack.c.b16 %v407, %v406
  %v418 = vpack.c.b16 %v409, %v408
  %v419 = vpack.c.b16 %v411, %v410
  %428 = vmatprep.subr.bf16.mxu0 0
  %429 = vmatpush1.bf16.msra.mxu0 %v419
  %430 = vmatprep.subr.bf16.mxu0 0
  %431 = vmatpush1.bf16.msra.mxu0 %v418
  %432 = vmatprep.subr.bf16.mxu0 0
  %433 = vmatpush1.bf16.msra.mxu0 %v417
  %434 = vmatprep.subr.bf16.mxu0 0
  %435 = vmatpush1.bf16.msra.mxu0 %v416
  %436 = vmatprep.subr.bf16.mxu0 0
  %437 = vmatpush1.bf16.msra.mxu0 %v415
  %438 = vmatprep.subr.bf16.mxu0 0
  %439 = vmatpush1.bf16.msra.mxu0 %v414
  %440 = vmatprep.subr.bf16.mxu0 0
  %441 = vmatpush1.bf16.msra.mxu0 %v413
  %442 = vmatprep.subr.bf16.mxu0 0
  %443 = vmatpush1.bf16.msra.mxu0 %v412
  %444 = vmatprep.subr.bf16.mxu0 0
  %445 = vmatpush2.bf16.msra.mxu0 0
  %446 = vmatprep.subr.bf16.mxu0 0
  %447 = vmatpush2.bf16.msra.mxu0 0
  %448 = vmatprep.subr.bf16.mxu0 0
  %449 = vmatpush2.bf16.msra.mxu0 0
  %450 = vmatprep.subr.bf16.mxu0 0
  %451 = vmatpush2.bf16.msra.mxu0 0
  %452 = vmatprep.subr.bf16.mxu0 0
  %453 = vmatpush2.bf16.msra.mxu0 0
  %454 = vmatprep.subr.bf16.mxu0 0
  %455 = vmatpush2.bf16.msra.mxu0 0
  %456 = vmatprep.subr.bf16.mxu0 0
  %457 = vmatpush2.bf16.msra.mxu0 0
  %458 = vmatprep.subr.bf16.mxu0 0
  %459 = vmatpush2.bf16.msra.mxu0 0
  %460 = vmatprep.mubr.bf16.mxu0 0
  %461 = vmatmul.mubr.bf16.gmra.mxu0 %v355
  %v462 = vpop.f32.mrf.mxu0
  %v463 = vadd.f32 0.0, %v462
  %v464 = vpop.f32.mrf.mxu0
  %v465 = vpop.f32.mrf.mxu0
  %v466 = vadd.f32 0.0, %v465
  %v467 = vpop.f32.mrf.mxu0
  %468 = vmatprep.mubr.bf16.mxu0 0
  %469 = vmatmul.mubr.bf16.gmra.mxu0 %v356
  %v470 = vpop.f32.mrf.mxu0
  %v471 = vadd.f32 0.0, %v470
  %v472 = vpop.f32.mrf.mxu0
  %v473 = vpop.f32.mrf.mxu0
  %v474 = vadd.f32 0.0, %v473
  %v475 = vpop.f32.mrf.mxu0
  %476 = vmatprep.mubr.bf16.mxu0 0
  %477 = vmatmul.mubr.bf16.gmra.mxu0 %v357
  %v478 = vpop.f32.mrf.mxu0
  %v479 = vadd.f32 0.0, %v478
  %v480 = vpop.f32.mrf.mxu0
  %v481 = vpop.f32.mrf.mxu0
  %v482 = vadd.f32 0.0, %v481
  %v483 = vpop.f32.mrf.mxu0
  %484 = vmatprep.mubr.bf16.mxu0 0
  %485 = vmatmul.mubr.bf16.gmra.mxu0 %v358
  %v486 = vpop.f32.mrf.mxu0
  %v487 = vadd.f32 0.0, %v486
  %v488 = vpop.f32.mrf.mxu0
  %v489 = vpop.f32.mrf.mxu0
  %v490 = vadd.f32 0.0, %v489
  %v491 = vpop.f32.mrf.mxu0
  %492 = vmatprep.mubr.bf16.mxu0 0
  %493 = vmatmul.mubr.bf16.gmra.mxu0 %v359
  %v494 = vpop.f32.mrf.mxu0
  %v495 = vadd.f32 0.0, %v494
  %v496 = vpop.f32.mrf.mxu0
  %v497 = vpop.f32.mrf.mxu0
  %v498 = vadd.f32 0.0, %v497
  %v499 = vpop.f32.mrf.mxu0
  %500 = vmatprep.mubr.bf16.mxu0 0
  %501 = vmatmul.mubr.bf16.gmra.mxu0 %v360
  %v502 = vpop.f32.mrf.mxu0
  %v503 = vadd.f32 0.0, %v502
  %v504 = vpop.f32.mrf.mxu0
  %v505 = vpop.f32.mrf.mxu0
  %v506 = vadd.f32 0.0, %v505
  %v507 = vpop.f32.mrf.mxu0
  %508 = vmatprep.mubr.bf16.mxu0 0
  %509 = vmatmul.mubr.bf16.gmra.mxu0 %v361
  %v510 = vpop.f32.mrf.mxu0
  %v511 = vadd.f32 0.0, %v510
  %v512 = vpop.f32.mrf.mxu0
  %v513 = vpop.f32.mrf.mxu0
  %v514 = vadd.f32 0.0, %v513
  %v515 = vpop.f32.mrf.mxu0
  %516 = vmatprep.mubr.bf16.mxu0 0
  %517 = vmatmul.mubr.bf16.gmra.mxu0 %v362
  %v518 = vpop.f32.mrf.mxu0
  %v519 = vadd.f32 0.0, %v518
  %v520 = vpop.f32.mrf.mxu0
  %v521 = vpop.f32.mrf.mxu0
  %v522 = vadd.f32 0.0, %v521
  %v523 = vpop.f32.mrf.mxu0
  %524 = vdwg.mxu0
  %v541 = vunpack.c.l.b16 %v273
  %v542 = vunpack.c.l.b16 %v274
  %v543 = vunpack.c.l.b16 %v275
  %v544 = vunpack.c.l.b16 %v276
  %v545 = vunpack.c.l.b16 %v277
  %v546 = vunpack.c.l.b16 %v278
  %v547 = vunpack.c.l.b16 %v279
  %v548 = vunpack.c.l.b16 %v280
  %v549 = vunpack.c.l.b16 %v281
  %v550 = vunpack.c.l.b16 %v282
  %v551 = vunpack.c.l.b16 %v283
  %v552 = vunpack.c.l.b16 %v284
  %v553 = vunpack.c.l.b16 %v285
  %v554 = vunpack.c.l.b16 %v286
  %v555 = vunpack.c.l.b16 %v287
  %v556 = vunpack.c.l.b16 %v288
  %v557 = vpack.c.b16 %v542, %v541
  %v558 = vpack.c.b16 %v544, %v543
  %v559 = vpack.c.b16 %v546, %v545
  %v560 = vpack.c.b16 %v548, %v547
  %v561 = vpack.c.b16 %v550, %v549
  %v562 = vpack.c.b16 %v552, %v551
  %v563 = vpack.c.b16 %v554, %v553
  %v564 = vpack.c.b16 %v556, %v555
  %573 = vmatprep.subr.bf16.mxu0 0
  %574 = vmatpush1.bf16.msra.mxu0 %v564
  %575 = vmatprep.subr.bf16.mxu0 0
  %576 = vmatpush1.bf16.msra.mxu0 %v563
  %577 = vmatprep.subr.bf16.mxu0 0
  %578 = vmatpush1.bf16.msra.mxu0 %v562
  %579 = vmatprep.subr.bf16.mxu0 0
  %580 = vmatpush1.bf16.msra.mxu0 %v561
  %581 = vmatprep.subr.bf16.mxu0 0
  %582 = vmatpush1.bf16.msra.mxu0 %v560
  %583 = vmatprep.subr.bf16.mxu0 0
  %584 = vmatpush1.bf16.msra.mxu0 %v559
  %585 = vmatprep.subr.bf16.mxu0 0
  %586 = vmatpush1.bf16.msra.mxu0 %v558
  %587 = vmatprep.subr.bf16.mxu0 0
  %588 = vmatpush1.bf16.msra.mxu0 %v557
  %589 = vmatprep.subr.bf16.mxu0 0
  %590 = vmatpush2.bf16.msra.mxu0 0
  %591 = vmatprep.subr.bf16.mxu0 0
  %592 = vmatpush2.bf16.msra.mxu0 0
  %593 = vmatprep.subr.bf16.mxu0 0
  %594 = vmatpush2.bf16.msra.mxu0 0
  %595 = vmatprep.subr.bf16.mxu0 0
  %596 = vmatpush2.bf16.msra.mxu0 0
  %597 = vmatprep.subr.bf16.mxu0 0
  %598 = vmatpush2.bf16.msra.mxu0 0
  %599 = vmatprep.subr.bf16.mxu0 0
  %600 = vmatpush2.bf16.msra.mxu0 0
  %601 = vmatprep.subr.bf16.mxu0 0
  %602 = vmatpush2.bf16.msra.mxu0 0
  %603 = vmatprep.subr.bf16.mxu0 0
  %604 = vmatpush2.bf16.msra.mxu0 0
  %605 = vmatprep.mubr.bf16.mxu0 0
  %606 = vmatmul.mubr.bf16.gmra.mxu0 %v264
  %v607 = vpop.f32.mrf.mxu0
  %v608 = vadd.f32 %v463, %v607
  %v609 = vpop.f32.mrf.mxu0
  %v610 = vpop.f32.mrf.mxu0
  %v611 = vadd.f32 %v466, %v610
  %v612 = vpop.f32.mrf.mxu0
  %613 = vmatprep.mubr.bf16.mxu0 0
  %614 = vmatmul.mubr.bf16.gmra.mxu0 %v265
  %v615 = vpop.f32.mrf.mxu0
  %v616 = vadd.f32 %v471, %v615
  %v617 = vpop.f32.mrf.mxu0
  %v618 = vpop.f32.mrf.mxu0
  %v619 = vadd.f32 %v474, %v618
  %v620 = vpop.f32.mrf.mxu0
  %621 = vmatprep.mubr.bf16.mxu0 0
  %622 = vmatmul.mubr.bf16.gmra.mxu0 %v266
  %v623 = vpop.f32.mrf.mxu0
  %v624 = vadd.f32 %v479, %v623
  %v625 = vpop.f32.mrf.mxu0
  %v626 = vpop.f32.mrf.mxu0
  %v627 = vadd.f32 %v482, %v626
  %v628 = vpop.f32.mrf.mxu0
  %629 = vmatprep.mubr.bf16.mxu0 0
  %630 = vmatmul.mubr.bf16.gmra.mxu0 %v267
  %v631 = vpop.f32.mrf.mxu0
  %v632 = vadd.f32 %v487, %v631
  %v633 = vpop.f32.mrf.mxu0
  %v634 = vpop.f32.mrf.mxu0
  %v635 = vadd.f32 %v490, %v634
  %v636 = vpop.f32.mrf.mxu0
  %637 = vmatprep.mubr.bf16.mxu0 0
  %638 = vmatmul.mubr.bf16.gmra.mxu0 %v268
  %v639 = vpop.f32.mrf.mxu0
  %v640 = vadd.f32 %v495, %v639
  %v641 = vpop.f32.mrf.mxu0
  %v642 = vpop.f32.mrf.mxu0
  %v643 = vadd.f32 %v498, %v642
  %v644 = vpop.f32.mrf.mxu0
  %645 = vmatprep.mubr.bf16.mxu0 0
  %646 = vmatmul.mubr.bf16.gmra.mxu0 %v269
  %v647 = vpop.f32.mrf.mxu0
  %v648 = vadd.f32 %v503, %v647
  %v649 = vpop.f32.mrf.mxu0
  %v650 = vpop.f32.mrf.mxu0
  %v651 = vadd.f32 %v506, %v650
  %v652 = vpop.f32.mrf.mxu0
  %653 = vmatprep.mubr.bf16.mxu0 0
  %654 = vmatmul.mubr.bf16.gmra.mxu0 %v270
  %v655 = vpop.f32.mrf.mxu0
  %v656 = vadd.f32 %v511, %v655
  %v657 = vpop.f32.mrf.mxu0
  %v658 = vpop.f32.mrf.mxu0
  %v659 = vadd.f32 %v514, %v658
  %v660 = vpop.f32.mrf.mxu0
  %661 = vmatprep.mubr.bf16.mxu0 0
  %662 = vmatmul.mubr.bf16.gmra.mxu0 %v271
  %v663 = vpop.f32.mrf.mxu0
  %v664 = vadd.f32 %v519, %v663
  %v665 = vpop.f32.mrf.mxu0
  %v666 = vpop.f32.mrf.mxu0
  %v667 = vadd.f32 %v522, %v666
  %v668 = vpop.f32.mrf.mxu0
  %669 = vdwg.mxu0
  %vm670 = vcmask 1045504
  %v671 = vrot.slane %v248, 2
  %v672 = vrot.slane %v249, 2
  %v673 = vsel %vm670, %v671, %v672
  %v674 = vrot.slane %v250, 2
  %v675 = vsel %vm670, %v672, %v674
  %v676 = vrot.slane %v251, 2
  %v677 = vsel %vm670, %v674, %v676
  %v678 = vrot.slane %v252, 2
  %v679 = vsel %vm670, %v676, %v678
  %v680 = vrot.slane %v253, 2
  %v681 = vsel %vm670, %v678, %v680
  %v682 = vrot.slane %v254, 2
  %v683 = vsel %vm670, %v680, %v682
  %v684 = vrot.slane %v255, 2
  %v685 = vsel %vm670, %v682, %v684
  %v686 = vrot.slane %v256, 2
  %v687 = vsel %vm670, %v684, %v686
  %v688 = vrot.slane %v257, 2
  %v689 = vsel %vm670, %v686, %v688
  %v690 = vrot.slane %v258, 2
  %v691 = vsel %vm670, %v688, %v690
  %v692 = vrot.slane %v259, 2
  %v693 = vsel %vm670, %v690, %v692
  %v694 = vrot.slane %v260, 2
  %v695 = vsel %vm670, %v692, %v694
  %v696 = vrot.slane %v261, 2
  %v697 = vsel %vm670, %v694, %v696
  %v698 = vrot.slane %v262, 2
  %v699 = vsel %vm670, %v696, %v698
  %v700 = vrot.slane %v263, 2
  %v701 = vsel %vm670, %v698, %v700
  %v719 = vsel %vm670, %v700, %v671
  %v720 = vpack.c.bf16 %v675, %v673
  %v721 = vpack.c.bf16 %v679, %v677
  %v722 = vpack.c.bf16 %v683, %v681
  %v723 = vpack.c.bf16 %v687, %v685
  %v724 = vpack.c.bf16 %v691, %v689
  %v725 = vpack.c.bf16 %v695, %v693
  %v726 = vpack.c.bf16 %v699, %v697
  %v727 = vpack.c.bf16 %v719, %v701
  %s728 = scalar_lea.vmem %s1, 192
  %v729 = vld [vmem:[%s728] sm:$0xf]
  %v730 = vld [vmem:[%s728 + $0x4] sm:$0xf]
  %v731 = vld [vmem:[%s728 + $0x8] sm:$0xf]
  %v732 = vld [vmem:[%s728 + $0xc] sm:$0xf]
  %v733 = vld [vmem:[%s728 + $0x10] sm:$0xf]
  %v734 = vld [vmem:[%s728 + $0x14] sm:$0xf]
  %v735 = vld [vmem:[%s728 + $0x18] sm:$0xf]
  %v736 = vld [vmem:[%s728 + $0x1c] sm:$0xf]
  %v737 = vld [vmem:[%s728 + $0x20] sm:$0xf]
  %v738 = vld [vmem:[%s728 + $0x24] sm:$0xf]
  %v739 = vld [vmem:[%s728 + $0x28] sm:$0xf]
  %v740 = vld [vmem:[%s728 + $0x2c] sm:$0xf]
  %v741 = vld [vmem:[%s728 + $0x30] sm:$0xf]
  %v742 = vld [vmem:[%s728 + $0x34] sm:$0xf]
  %v743 = vld [vmem:[%s728 + $0x38] sm:$0xf]
  %v744 = vld [vmem:[%s728 + $0x3c] sm:$0xf]
  %v761 = vunpack.c.l.b16 %v729
  %v762 = vunpack.c.l.b16 %v730
  %v763 = vunpack.c.l.b16 %v731
  %v764 = vunpack.c.l.b16 %v732
  %v765 = vunpack.c.l.b16 %v733
  %v766 = vunpack.c.l.b16 %v734
  %v767 = vunpack.c.l.b16 %v735
  %v768 = vunpack.c.l.b16 %v736
  %v769 = vunpack.c.l.b16 %v737
  %v770 = vunpack.c.l.b16 %v738
  %v771 = vunpack.c.l.b16 %v739
  %v772 = vunpack.c.l.b16 %v740
  %v773 = vunpack.c.l.b16 %v741
  %v774 = vunpack.c.l.b16 %v742
  %v775 = vunpack.c.l.b16 %v743
  %v776 = vunpack.c.l.b16 %v744
  %v777 = vpack.c.b16 %v762, %v761
  %v778 = vpack.c.b16 %v764, %v763
  %v779 = vpack.c.b16 %v766, %v765
  %v780 = vpack.c.b16 %v768, %v767
  %v781 = vpack.c.b16 %v770, %v769
  %v782 = vpack.c.b16 %v772, %v771
  %v783 = vpack.c.b16 %v774, %v773
  %v784 = vpack.c.b16 %v776, %v775
  %793 = vmatprep.subr.bf16.mxu0 0
  %794 = vmatpush1.bf16.msra.mxu0 %v784
  %795 = vmatprep.subr.bf16.mxu0 0
  %796 = vmatpush1.bf16.msra.mxu0 %v783
  %797 = vmatprep.subr.bf16.mxu0 0
  %798 = vmatpush1.bf16.msra.mxu0 %v782
  %799 = vmatprep.subr.bf16.mxu0 0
  %800 = vmatpush1.bf16.msra.mxu0 %v781
  %801 = vmatprep.subr.bf16.mxu0 0
  %802 = vmatpush1.bf16.msra.mxu0 %v780
  %803 = vmatprep.subr.bf16.mxu0 0
  %804 = vmatpush1.bf16.msra.mxu0 %v779
  %805 = vmatprep.subr.bf16.mxu0 0
  %806 = vmatpush1.bf16.msra.mxu0 %v778
  %807 = vmatprep.subr.bf16.mxu0 0
  %808 = vmatpush1.bf16.msra.mxu0 %v777
  %809 = vmatprep.subr.bf16.mxu0 0
  %810 = vmatpush2.bf16.msra.mxu0 0
  %811 = vmatprep.subr.bf16.mxu0 0
  %812 = vmatpush2.bf16.msra.mxu0 0
  %813 = vmatprep.subr.bf16.mxu0 0
  %814 = vmatpush2.bf16.msra.mxu0 0
  %815 = vmatprep.subr.bf16.mxu0 0
  %816 = vmatpush2.bf16.msra.mxu0 0
  %817 = vmatprep.subr.bf16.mxu0 0
  %818 = vmatpush2.bf16.msra.mxu0 0
  %819 = vmatprep.subr.bf16.mxu0 0
  %820 = vmatpush2.bf16.msra.mxu0 0
  %821 = vmatprep.subr.bf16.mxu0 0
  %822 = vmatpush2.bf16.msra.mxu0 0
  %823 = vmatprep.subr.bf16.mxu0 0
  %824 = vmatpush2.bf16.msra.mxu0 0
  %825 = vmatprep.mubr.bf16.mxu0 0
  %826 = vmatmul.mubr.bf16.gmra.mxu0 %v720
  %v827 = vpop.f32.mrf.mxu0
  %v828 = vadd.f32 0.0, %v827
  %v829 = vpop.f32.mrf.mxu0
  %v830 = vpop.f32.mrf.mxu0
  %v831 = vadd.f32 0.0, %v830
  %v832 = vpop.f32.mrf.mxu0
  %833 = vmatprep.mubr.bf16.mxu0 0
  %834 = vmatmul.mubr.bf16.gmra.mxu0 %v721
  %v835 = vpop.f32.mrf.mxu0
  %v836 = vadd.f32 0.0, %v835
  %v837 = vpop.f32.mrf.mxu0
  %v838 = vpop.f32.mrf.mxu0
  %v839 = vadd.f32 0.0, %v838
  %v840 = vpop.f32.mrf.mxu0
  %841 = vmatprep.mubr.bf16.mxu0 0
  %842 = vmatmul.mubr.bf16.gmra.mxu0 %v722
  %v843 = vpop.f32.mrf.mxu0
  %v844 = vadd.f32 0.0, %v843
  %v845 = vpop.f32.mrf.mxu0
  %v846 = vpop.f32.mrf.mxu0
  %v847 = vadd.f32 0.0, %v846
  %v848 = vpop.f32.mrf.mxu0
  %849 = vmatprep.mubr.bf16.mxu0 0
  %850 = vmatmul.mubr.bf16.gmra.mxu0 %v723
  %v851 = vpop.f32.mrf.mxu0
  %v852 = vadd.f32 0.0, %v851
  %v853 = vpop.f32.mrf.mxu0
  %v854 = vpop.f32.mrf.mxu0
  %v855 = vadd.f32 0.0, %v854
  %v856 = vpop.f32.mrf.mxu0
  %857 = vmatprep.mubr.bf16.mxu0 0
  %858 = vmatmul.mubr.bf16.gmra.mxu0 %v724
  %v859 = vpop.f32.mrf.mxu0
  %v860 = vadd.f32 0.0, %v859
  %v861 = vpop.f32.mrf.mxu0
  %v862 = vpop.f32.mrf.mxu0
  %v863 = vadd.f32 0.0, %v862
  %v864 = vpop.f32.mrf.mxu0
  %865 = vmatprep.mubr.bf16.mxu0 0
  %866 = vmatmul.mubr.bf16.gmra.mxu0 %v725
  %v867 = vpop.f32.mrf.mxu0
  %v868 = vadd.f32 0.0, %v867
  %v869 = vpop.f32.mrf.mxu0
  %v870 = vpop.f32.mrf.mxu0
  %v871 = vadd.f32 0.0, %v870
  %v872 = vpop.f32.mrf.mxu0
  %873 = vmatprep.mubr.bf16.mxu0 0
  %874 = vmatmul.mubr.bf16.gmra.mxu0 %v726
  %v875 = vpop.f32.mrf.mxu0
  %v876 = vadd.f32 0.0, %v875
  %v877 = vpop.f32.mrf.mxu0
  %v878 = vpop.f32.mrf.mxu0
  %v879 = vadd.f32 0.0, %v878
  %v880 = vpop.f32.mrf.mxu0
  %881 = vmatprep.mubr.bf16.mxu0 0
  %882 = vmatmul.mubr.bf16.gmra.mxu0 %v727
  %v883 = vpop.f32.mrf.mxu0
  %v884 = vadd.f32 0.0, %v883
  %v885 = vpop.f32.mrf.mxu0
  %v886 = vpop.f32.mrf.mxu0
  %v887 = vadd.f32 0.0, %v886
  %v888 = vpop.f32.mrf.mxu0
  %889 = vdwg.mxu0
  %v890 = vadd.f32 %v608, %v828
  %v891 = vadd.f32 %v611, %v831
  %v892 = vadd.f32 %v616, %v836
  %v893 = vadd.f32 %v619, %v839
  %v894 = vadd.f32 %v624, %v844
  %v895 = vadd.f32 %v627, %v847
  %v896 = vadd.f32 %v632, %v852
  %v897 = vadd.f32 %v635, %v855
  %v898 = vadd.f32 %v640, %v860
  %v899 = vadd.f32 %v643, %v863
  %v900 = vadd.f32 %v648, %v868
  %v901 = vadd.f32 %v651, %v871
  %v902 = vadd.f32 %v656, %v876
  %v903 = vadd.f32 %v659, %v879
  %v904 = vadd.f32 %v664, %v884
  %v905 = vadd.f32 %v667, %v887
  %v906 = vlaneseq
  %v907 = vshrl.u32 %v906, 7
  %v908 = vsub.s32 1, %v907
  %v909 = vrot.slane %v18, %v908
  %v910 = vadd.f32 %v890, %v909
  %v911 = vadd.f32 %v891, %v909
  %v912 = vadd.f32 %v892, %v909
  %v913 = vadd.f32 %v893, %v909
  %v914 = vadd.f32 %v894, %v909
  %v915 = vadd.f32 %v895, %v909
  %v916 = vadd.f32 %v896, %v909
  %v917 = vadd.f32 %v897, %v909
  %v918 = vadd.f32 %v898, %v909
  %v919 = vadd.f32 %v899, %v909
  %v920 = vadd.f32 %v900, %v909
  %v921 = vadd.f32 %v901, %v909
  %v922 = vadd.f32 %v902, %v909
  %v923 = vadd.f32 %v903, %v909
  %v924 = vadd.f32 %v904, %v909
  %v925 = vadd.f32 %v905, %v909
  %v926 = vmax.f32 %v910, 0.0
  %v927 = vmax.f32 %v911, 0.0
  %v928 = vmax.f32 %v912, 0.0
  %v929 = vmax.f32 %v913, 0.0
  %v930 = vmax.f32 %v914, 0.0
  %v931 = vmax.f32 %v915, 0.0
  %v932 = vmax.f32 %v916, 0.0
  %v933 = vmax.f32 %v917, 0.0
  %v934 = vmax.f32 %v918, 0.0
  %v935 = vmax.f32 %v919, 0.0
  %v936 = vmax.f32 %v920, 0.0
  %v937 = vmax.f32 %v921, 0.0
  %v938 = vmax.f32 %v922, 0.0
  %v939 = vmax.f32 %v923, 0.0
  %v940 = vmax.f32 %v924, 0.0
  %v941 = vmax.f32 %v925, 0.0
  %v942 = vpack.c.bf16 %v927, %v926
  %v943 = vpack.c.bf16 %v929, %v928
  %v944 = vpack.c.bf16 %v931, %v930
  %v945 = vpack.c.bf16 %v933, %v932
  %v946 = vpack.c.bf16 %v935, %v934
  %v947 = vpack.c.bf16 %v937, %v936
  %v948 = vpack.c.bf16 %v939, %v938
  %v949 = vpack.c.bf16 %v941, %v940
  %s950 = scalar_lea.vmem %s1, 256
  %v951 = vld [vmem:[%s950] sm:$0xf]
  %v952 = vld [vmem:[%s950 + $0x4] sm:$0xf]
  %v953 = vld [vmem:[%s950 + $0x8] sm:$0xf]
  %v954 = vld [vmem:[%s950 + $0xc] sm:$0xf]
  %v955 = vld [vmem:[%s950 + $0x10] sm:$0xf]
  %v956 = vld [vmem:[%s950 + $0x14] sm:$0xf]
  %v957 = vld [vmem:[%s950 + $0x18] sm:$0xf]
  %v958 = vld [vmem:[%s950 + $0x1c] sm:$0xf]
  %v959 = vld [vmem:[%s950 + $0x20] sm:$0xf]
  %v960 = vld [vmem:[%s950 + $0x24] sm:$0xf]
  %v961 = vld [vmem:[%s950 + $0x28] sm:$0xf]
  %v962 = vld [vmem:[%s950 + $0x2c] sm:$0xf]
  %v963 = vld [vmem:[%s950 + $0x30] sm:$0xf]
  %v964 = vld [vmem:[%s950 + $0x34] sm:$0xf]
  %v965 = vld [vmem:[%s950 + $0x38] sm:$0xf]
  %v966 = vld [vmem:[%s950 + $0x3c] sm:$0xf]
  %v983 = vrot.slane %v926, 1
  %v984 = vrot.slane %v927, 1
  %v985 = vsel %vm305, %v983, %v984
  %v986 = vrot.slane %v928, 1
  %v987 = vsel %vm305, %v984, %v986
  %v988 = vrot.slane %v929, 1
  %v989 = vsel %vm305, %v986, %v988
  %v990 = vrot.slane %v930, 1
  %v991 = vsel %vm305, %v988, %v990
  %v992 = vrot.slane %v931, 1
  %v993 = vsel %vm305, %v990, %v992
  %v994 = vrot.slane %v932, 1
  %v995 = vsel %vm305, %v992, %v994
  %v996 = vrot.slane %v933, 1
  %v997 = vsel %vm305, %v994, %v996
  %v998 = vrot.slane %v934, 1
  %v999 = vsel %vm305, %v996, %v998
  %v1000 = vrot.slane %v935, 1
  %v1001 = vsel %vm305, %v998, %v1000
  %v1002 = vrot.slane %v936, 1
  %v1003 = vsel %vm305, %v1000, %v1002
  %v1004 = vrot.slane %v937, 1
  %v1005 = vsel %vm305, %v1002, %v1004
  %v1006 = vrot.slane %v938, 1
  %v1007 = vsel %vm305, %v1004, %v1006
  %v1008 = vrot.slane %v939, 1
  %v1009 = vsel %vm305, %v1006, %v1008
  %v1010 = vrot.slane %v940, 1
  %v1011 = vsel %vm305, %v1008, %v1010
  %v1012 = vrot.slane %v941, 1
  %v1013 = vsel %vm305, %v1010, %v1012
  %v1031 = vsel %vm305, %v1012, %v983
  %v1032 = vpack.c.bf16 %v987, %v985
  %v1033 = vpack.c.bf16 %v991, %v989
  %v1034 = vpack.c.bf16 %v995, %v993
  %v1035 = vpack.c.bf16 %v999, %v997
  %v1036 = vpack.c.bf16 %v1003, %v1001
  %v1037 = vpack.c.bf16 %v1007, %v1005
  %v1038 = vpack.c.bf16 %v1011, %v1009
  %v1039 = vpack.c.bf16 %v1031, %v1013
  %s1040 = scalar_lea.vmem %s1, 320
  %v1041 = vld [vmem:[%s1040] sm:$0xf]
  %v1042 = vld [vmem:[%s1040 + $0x4] sm:$0xf]
  %v1043 = vld [vmem:[%s1040 + $0x8] sm:$0xf]
  %v1044 = vld [vmem:[%s1040 + $0xc] sm:$0xf]
  %v1045 = vld [vmem:[%s1040 + $0x10] sm:$0xf]
  %v1046 = vld [vmem:[%s1040 + $0x14] sm:$0xf]
  %v1047 = vld [vmem:[%s1040 + $0x18] sm:$0xf]
  %v1048 = vld [vmem:[%s1040 + $0x1c] sm:$0xf]
  %v1049 = vld [vmem:[%s1040 + $0x20] sm:$0xf]
  %v1050 = vld [vmem:[%s1040 + $0x24] sm:$0xf]
  %v1051 = vld [vmem:[%s1040 + $0x28] sm:$0xf]
  %v1052 = vld [vmem:[%s1040 + $0x2c] sm:$0xf]
  %v1053 = vld [vmem:[%s1040 + $0x30] sm:$0xf]
  %v1054 = vld [vmem:[%s1040 + $0x34] sm:$0xf]
  %v1055 = vld [vmem:[%s1040 + $0x38] sm:$0xf]
  %v1056 = vld [vmem:[%s1040 + $0x3c] sm:$0xf]
  %v1073 = vunpack.c.l.b16 %v1041
  %v1074 = vunpack.c.l.b16 %v1042
  %v1075 = vunpack.c.l.b16 %v1043
  %v1076 = vunpack.c.l.b16 %v1044
  %v1077 = vunpack.c.l.b16 %v1045
  %v1078 = vunpack.c.l.b16 %v1046
  %v1079 = vunpack.c.l.b16 %v1047
  %v1080 = vunpack.c.l.b16 %v1048
  %v1081 = vunpack.c.l.b16 %v1049
  %v1082 = vunpack.c.l.b16 %v1050
  %v1083 = vunpack.c.l.b16 %v1051
  %v1084 = vunpack.c.l.b16 %v1052
  %v1085 = vunpack.c.l.b16 %v1053
  %v1086 = vunpack.c.l.b16 %v1054
  %v1087 = vunpack.c.l.b16 %v1055
  %v1088 = vunpack.c.l.b16 %v1056
  %v1089 = vpack.c.b16 %v1074, %v1073
  %v1090 = vpack.c.b16 %v1076, %v1075
  %v1091 = vpack.c.b16 %v1078, %v1077
  %v1092 = vpack.c.b16 %v1080, %v1079
  %v1093 = vpack.c.b16 %v1082, %v1081
  %v1094 = vpack.c.b16 %v1084, %v1083
  %v1095 = vpack.c.b16 %v1086, %v1085
  %v1096 = vpack.c.b16 %v1088, %v1087
  %1105 = vmatprep.subr.bf16.mxu0 0
  %1106 = vmatpush1.bf16.msra.mxu0 %v1096
  %1107 = vmatprep.subr.bf16.mxu0 0
  %1108 = vmatpush1.bf16.msra.mxu0 %v1095
  %1109 = vmatprep.subr.bf16.mxu0 0
  %1110 = vmatpush1.bf16.msra.mxu0 %v1094
  %1111 = vmatprep.subr.bf16.mxu0 0
  %1112 = vmatpush1.bf16.msra.mxu0 %v1093
  %1113 = vmatprep.subr.bf16.mxu0 0
  %1114 = vmatpush1.bf16.msra.mxu0 %v1092
  %1115 = vmatprep.subr.bf16.mxu0 0
  %1116 = vmatpush1.bf16.msra.mxu0 %v1091
  %1117 = vmatprep.subr.bf16.mxu0 0
  %1118 = vmatpush1.bf16.msra.mxu0 %v1090
  %1119 = vmatprep.subr.bf16.mxu0 0
  %1120 = vmatpush1.bf16.msra.mxu0 %v1089
  %1121 = vmatprep.subr.bf16.mxu0 0
  %1122 = vmatpush2.bf16.msra.mxu0 0
  %1123 = vmatprep.subr.bf16.mxu0 0
  %1124 = vmatpush2.bf16.msra.mxu0 0
  %1125 = vmatprep.subr.bf16.mxu0 0
  %1126 = vmatpush2.bf16.msra.mxu0 0
  %1127 = vmatprep.subr.bf16.mxu0 0
  %1128 = vmatpush2.bf16.msra.mxu0 0
  %1129 = vmatprep.subr.bf16.mxu0 0
  %1130 = vmatpush2.bf16.msra.mxu0 0
  %1131 = vmatprep.subr.bf16.mxu0 0
  %1132 = vmatpush2.bf16.msra.mxu0 0
  %1133 = vmatprep.subr.bf16.mxu0 0
  %1134 = vmatpush2.bf16.msra.mxu0 0
  %1135 = vmatprep.subr.bf16.mxu0 0
  %1136 = vmatpush2.bf16.msra.mxu0 0
  %1137 = vmatprep.mubr.bf16.mxu0 0
  %1138 = vmatmul.mubr.bf16.gmra.mxu0 %v1032
  %v1139 = vpop.f32.mrf.mxu0
  %v1140 = vadd.f32 0.0, %v1139
  %v1141 = vpop.f32.mrf.mxu0
  %v1142 = vpop.f32.mrf.mxu0
  %v1143 = vadd.f32 0.0, %v1142
  %v1144 = vpop.f32.mrf.mxu0
  %1145 = vmatprep.mubr.bf16.mxu0 0
  %1146 = vmatmul.mubr.bf16.gmra.mxu0 %v1033
  %v1147 = vpop.f32.mrf.mxu0
  %v1148 = vadd.f32 0.0, %v1147
  %v1149 = vpop.f32.mrf.mxu0
  %v1150 = vpop.f32.mrf.mxu0
  %v1151 = vadd.f32 0.0, %v1150
  %v1152 = vpop.f32.mrf.mxu0
  %1153 = vmatprep.mubr.bf16.mxu0 0
  %1154 = vmatmul.mubr.bf16.gmra.mxu0 %v1034
  %v1155 = vpop.f32.mrf.mxu0
  %v1156 = vadd.f32 0.0, %v1155
  %v1157 = vpop.f32.mrf.mxu0
  %v1158 = vpop.f32.mrf.mxu0
  %v1159 = vadd.f32 0.0, %v1158
  %v1160 = vpop.f32.mrf.mxu0
  %1161 = vmatprep.mubr.bf16.mxu0 0
  %1162 = vmatmul.mubr.bf16.gmra.mxu0 %v1035
  %v1163 = vpop.f32.mrf.mxu0
  %v1164 = vadd.f32 0.0, %v1163
  %v1165 = vpop.f32.mrf.mxu0
  %v1166 = vpop.f32.mrf.mxu0
  %v1167 = vadd.f32 0.0, %v1166
  %v1168 = vpop.f32.mrf.mxu0
  %1169 = vmatprep.mubr.bf16.mxu0 0
  %1170 = vmatmul.mubr.bf16.gmra.mxu0 %v1036
  %v1171 = vpop.f32.mrf.mxu0
  %v1172 = vadd.f32 0.0, %v1171
  %v1173 = vpop.f32.mrf.mxu0
  %v1174 = vpop.f32.mrf.mxu0
  %v1175 = vadd.f32 0.0, %v1174
  %v1176 = vpop.f32.mrf.mxu0
  %1177 = vmatprep.mubr.bf16.mxu0 0
  %1178 = vmatmul.mubr.bf16.gmra.mxu0 %v1037
  %v1179 = vpop.f32.mrf.mxu0
  %v1180 = vadd.f32 0.0, %v1179
  %v1181 = vpop.f32.mrf.mxu0
  %v1182 = vpop.f32.mrf.mxu0
  %v1183 = vadd.f32 0.0, %v1182
  %v1184 = vpop.f32.mrf.mxu0
  %1185 = vmatprep.mubr.bf16.mxu0 0
  %1186 = vmatmul.mubr.bf16.gmra.mxu0 %v1038
  %v1187 = vpop.f32.mrf.mxu0
  %v1188 = vadd.f32 0.0, %v1187
  %v1189 = vpop.f32.mrf.mxu0
  %v1190 = vpop.f32.mrf.mxu0
  %v1191 = vadd.f32 0.0, %v1190
  %v1192 = vpop.f32.mrf.mxu0
  %1193 = vmatprep.mubr.bf16.mxu0 0
  %1194 = vmatmul.mubr.bf16.gmra.mxu0 %v1039
  %v1195 = vpop.f32.mrf.mxu0
  %v1196 = vadd.f32 0.0, %v1195
  %v1197 = vpop.f32.mrf.mxu0
  %v1198 = vpop.f32.mrf.mxu0
  %v1199 = vadd.f32 0.0, %v1198
  %v1200 = vpop.f32.mrf.mxu0
  %1201 = vdwg.mxu0
  %v1218 = vunpack.c.l.b16 %v951
  %v1219 = vunpack.c.l.b16 %v952
  %v1220 = vunpack.c.l.b16 %v953
  %v1221 = vunpack.c.l.b16 %v954
  %v1222 = vunpack.c.l.b16 %v955
  %v1223 = vunpack.c.l.b16 %v956
  %v1224 = vunpack.c.l.b16 %v957
  %v1225 = vunpack.c.l.b16 %v958
  %v1226 = vunpack.c.l.b16 %v959
  %v1227 = vunpack.c.l.b16 %v960
  %v1228 = vunpack.c.l.b16 %v961
  %v1229 = vunpack.c.l.b16 %v962
  %v1230 = vunpack.c.l.b16 %v963
  %v1231 = vunpack.c.l.b16 %v964
  %v1232 = vunpack.c.l.b16 %v965
  %v1233 = vunpack.c.l.b16 %v966
  %v1234 = vpack.c.b16 %v1219, %v1218
  %v1235 = vpack.c.b16 %v1221, %v1220
  %v1236 = vpack.c.b16 %v1223, %v1222
  %v1237 = vpack.c.b16 %v1225, %v1224
  %v1238 = vpack.c.b16 %v1227, %v1226
  %v1239 = vpack.c.b16 %v1229, %v1228
  %v1240 = vpack.c.b16 %v1231, %v1230
  %v1241 = vpack.c.b16 %v1233, %v1232
  %1250 = vmatprep.subr.bf16.mxu0 0
  %1251 = vmatpush1.bf16.msra.mxu0 %v1241
  %1252 = vmatprep.subr.bf16.mxu0 0
  %1253 = vmatpush1.bf16.msra.mxu0 %v1240
  %1254 = vmatprep.subr.bf16.mxu0 0
  %1255 = vmatpush1.bf16.msra.mxu0 %v1239
  %1256 = vmatprep.subr.bf16.mxu0 0
  %1257 = vmatpush1.bf16.msra.mxu0 %v1238
  %1258 = vmatprep.subr.bf16.mxu0 0
  %1259 = vmatpush1.bf16.msra.mxu0 %v1237
  %1260 = vmatprep.subr.bf16.mxu0 0
  %1261 = vmatpush1.bf16.msra.mxu0 %v1236
  %1262 = vmatprep.subr.bf16.mxu0 0
  %1263 = vmatpush1.bf16.msra.mxu0 %v1235
  %1264 = vmatprep.subr.bf16.mxu0 0
  %1265 = vmatpush1.bf16.msra.mxu0 %v1234
  %1266 = vmatprep.subr.bf16.mxu0 0
  %1267 = vmatpush2.bf16.msra.mxu0 0
  %1268 = vmatprep.subr.bf16.mxu0 0
  %1269 = vmatpush2.bf16.msra.mxu0 0
  %1270 = vmatprep.subr.bf16.mxu0 0
  %1271 = vmatpush2.bf16.msra.mxu0 0
  %1272 = vmatprep.subr.bf16.mxu0 0
  %1273 = vmatpush2.bf16.msra.mxu0 0
  %1274 = vmatprep.subr.bf16.mxu0 0
  %1275 = vmatpush2.bf16.msra.mxu0 0
  %1276 = vmatprep.subr.bf16.mxu0 0
  %1277 = vmatpush2.bf16.msra.mxu0 0
  %1278 = vmatprep.subr.bf16.mxu0 0
  %1279 = vmatpush2.bf16.msra.mxu0 0
  %1280 = vmatprep.subr.bf16.mxu0 0
  %1281 = vmatpush2.bf16.msra.mxu0 0
  %1282 = vmatprep.mubr.bf16.mxu0 0
  %1283 = vmatmul.mubr.bf16.gmra.mxu0 %v942
  %v1284 = vpop.f32.mrf.mxu0
  %v1285 = vadd.f32 %v1140, %v1284
  %v1286 = vpop.f32.mrf.mxu0
  %v1287 = vpop.f32.mrf.mxu0
  %v1288 = vadd.f32 %v1143, %v1287
  %v1289 = vpop.f32.mrf.mxu0
  %1290 = vmatprep.mubr.bf16.mxu0 0
  %1291 = vmatmul.mubr.bf16.gmra.mxu0 %v943
  %v1292 = vpop.f32.mrf.mxu0
  %v1293 = vadd.f32 %v1148, %v1292
  %v1294 = vpop.f32.mrf.mxu0
  %v1295 = vpop.f32.mrf.mxu0
  %v1296 = vadd.f32 %v1151, %v1295
  %v1297 = vpop.f32.mrf.mxu0
  %1298 = vmatprep.mubr.bf16.mxu0 0
  %1299 = vmatmul.mubr.bf16.gmra.mxu0 %v944
  %v1300 = vpop.f32.mrf.mxu0
  %v1301 = vadd.f32 %v1156, %v1300
  %v1302 = vpop.f32.mrf.mxu0
  %v1303 = vpop.f32.mrf.mxu0
  %v1304 = vadd.f32 %v1159, %v1303
  %v1305 = vpop.f32.mrf.mxu0
  %1306 = vmatprep.mubr.bf16.mxu0 0
  %1307 = vmatmul.mubr.bf16.gmra.mxu0 %v945
  %v1308 = vpop.f32.mrf.mxu0
  %v1309 = vadd.f32 %v1164, %v1308
  %v1310 = vpop.f32.mrf.mxu0
  %v1311 = vpop.f32.mrf.mxu0
  %v1312 = vadd.f32 %v1167, %v1311
  %v1313 = vpop.f32.mrf.mxu0
  %1314 = vmatprep.mubr.bf16.mxu0 0
  %1315 = vmatmul.mubr.bf16.gmra.mxu0 %v946
  %v1316 = vpop.f32.mrf.mxu0
  %v1317 = vadd.f32 %v1172, %v1316
  %v1318 = vpop.f32.mrf.mxu0
  %v1319 = vpop.f32.mrf.mxu0
  %v1320 = vadd.f32 %v1175, %v1319
  %v1321 = vpop.f32.mrf.mxu0
  %1322 = vmatprep.mubr.bf16.mxu0 0
  %1323 = vmatmul.mubr.bf16.gmra.mxu0 %v947
  %v1324 = vpop.f32.mrf.mxu0
  %v1325 = vadd.f32 %v1180, %v1324
  %v1326 = vpop.f32.mrf.mxu0
  %v1327 = vpop.f32.mrf.mxu0
  %v1328 = vadd.f32 %v1183, %v1327
  %v1329 = vpop.f32.mrf.mxu0
  %1330 = vmatprep.mubr.bf16.mxu0 0
  %1331 = vmatmul.mubr.bf16.gmra.mxu0 %v948
  %v1332 = vpop.f32.mrf.mxu0
  %v1333 = vadd.f32 %v1188, %v1332
  %v1334 = vpop.f32.mrf.mxu0
  %v1335 = vpop.f32.mrf.mxu0
  %v1336 = vadd.f32 %v1191, %v1335
  %v1337 = vpop.f32.mrf.mxu0
  %1338 = vmatprep.mubr.bf16.mxu0 0
  %1339 = vmatmul.mubr.bf16.gmra.mxu0 %v949
  %v1340 = vpop.f32.mrf.mxu0
  %v1341 = vadd.f32 %v1196, %v1340
  %v1342 = vpop.f32.mrf.mxu0
  %v1343 = vpop.f32.mrf.mxu0
  %v1344 = vadd.f32 %v1199, %v1343
  %v1345 = vpop.f32.mrf.mxu0
  %1346 = vdwg.mxu0
  %v1347 = vrot.slane %v926, 2
  %v1348 = vrot.slane %v927, 2
  %v1349 = vsel %vm670, %v1347, %v1348
  %v1350 = vrot.slane %v928, 2
  %v1351 = vsel %vm670, %v1348, %v1350
  %v1352 = vrot.slane %v929, 2
  %v1353 = vsel %vm670, %v1350, %v1352
  %v1354 = vrot.slane %v930, 2
  %v1355 = vsel %vm670, %v1352, %v1354
  %v1356 = vrot.slane %v931, 2
  %v1357 = vsel %vm670, %v1354, %v1356
  %v1358 = vrot.slane %v932, 2
  %v1359 = vsel %vm670, %v1356, %v1358
  %v1360 = vrot.slane %v933, 2
  %v1361 = vsel %vm670, %v1358, %v1360
  %v1362 = vrot.slane %v934, 2
  %v1363 = vsel %vm670, %v1360, %v1362
  %v1364 = vrot.slane %v935, 2
  %v1365 = vsel %vm670, %v1362, %v1364
  %v1366 = vrot.slane %v936, 2
  %v1367 = vsel %vm670, %v1364, %v1366
  %v1368 = vrot.slane %v937, 2
  %v1369 = vsel %vm670, %v1366, %v1368
  %v1370 = vrot.slane %v938, 2
  %v1371 = vsel %vm670, %v1368, %v1370
  %v1372 = vrot.slane %v939, 2
  %v1373 = vsel %vm670, %v1370, %v1372
  %v1374 = vrot.slane %v940, 2
  %v1375 = vsel %vm670, %v1372, %v1374
  %v1376 = vrot.slane %v941, 2
  %v1377 = vsel %vm670, %v1374, %v1376
  %v1395 = vsel %vm670, %v1376, %v1347
  %v1396 = vpack.c.bf16 %v1351, %v1349
  %v1397 = vpack.c.bf16 %v1355, %v1353
  %v1398 = vpack.c.bf16 %v1359, %v1357
  %v1399 = vpack.c.bf16 %v1363, %v1361
  %v1400 = vpack.c.bf16 %v1367, %v1365
  %v1401 = vpack.c.bf16 %v1371, %v1369
  %v1402 = vpack.c.bf16 %v1375, %v1373
  %v1403 = vpack.c.bf16 %v1395, %v1377
  %s1404 = scalar_lea.vmem %s1, 384
  %v1405 = vld [vmem:[%s1404] sm:$0xf]
  %v1406 = vld [vmem:[%s1404 + $0x4] sm:$0xf]
  %v1407 = vld [vmem:[%s1404 + $0x8] sm:$0xf]
  %v1408 = vld [vmem:[%s1404 + $0xc] sm:$0xf]
  %v1409 = vld [vmem:[%s1404 + $0x10] sm:$0xf]
  %v1410 = vld [vmem:[%s1404 + $0x14] sm:$0xf]
  %v1411 = vld [vmem:[%s1404 + $0x18] sm:$0xf]
  %v1412 = vld [vmem:[%s1404 + $0x1c] sm:$0xf]
  %v1413 = vld [vmem:[%s1404 + $0x20] sm:$0xf]
  %v1414 = vld [vmem:[%s1404 + $0x24] sm:$0xf]
  %v1415 = vld [vmem:[%s1404 + $0x28] sm:$0xf]
  %v1416 = vld [vmem:[%s1404 + $0x2c] sm:$0xf]
  %v1417 = vld [vmem:[%s1404 + $0x30] sm:$0xf]
  %v1418 = vld [vmem:[%s1404 + $0x34] sm:$0xf]
  %v1419 = vld [vmem:[%s1404 + $0x38] sm:$0xf]
  %v1420 = vld [vmem:[%s1404 + $0x3c] sm:$0xf]
  %v1437 = vunpack.c.l.b16 %v1405
  %v1438 = vunpack.c.l.b16 %v1406
  %v1439 = vunpack.c.l.b16 %v1407
  %v1440 = vunpack.c.l.b16 %v1408
  %v1441 = vunpack.c.l.b16 %v1409
  %v1442 = vunpack.c.l.b16 %v1410
  %v1443 = vunpack.c.l.b16 %v1411
  %v1444 = vunpack.c.l.b16 %v1412
  %v1445 = vunpack.c.l.b16 %v1413
  %v1446 = vunpack.c.l.b16 %v1414
  %v1447 = vunpack.c.l.b16 %v1415
  %v1448 = vunpack.c.l.b16 %v1416
  %v1449 = vunpack.c.l.b16 %v1417
  %v1450 = vunpack.c.l.b16 %v1418
  %v1451 = vunpack.c.l.b16 %v1419
  %v1452 = vunpack.c.l.b16 %v1420
  %v1453 = vpack.c.b16 %v1438, %v1437
  %v1454 = vpack.c.b16 %v1440, %v1439
  %v1455 = vpack.c.b16 %v1442, %v1441
  %v1456 = vpack.c.b16 %v1444, %v1443
  %v1457 = vpack.c.b16 %v1446, %v1445
  %v1458 = vpack.c.b16 %v1448, %v1447
  %v1459 = vpack.c.b16 %v1450, %v1449
  %v1460 = vpack.c.b16 %v1452, %v1451
  %1469 = vmatprep.subr.bf16.mxu0 0
  %1470 = vmatpush1.bf16.msra.mxu0 %v1460
  %1471 = vmatprep.subr.bf16.mxu0 0
  %1472 = vmatpush1.bf16.msra.mxu0 %v1459
  %1473 = vmatprep.subr.bf16.mxu0 0
  %1474 = vmatpush1.bf16.msra.mxu0 %v1458
  %1475 = vmatprep.subr.bf16.mxu0 0
  %1476 = vmatpush1.bf16.msra.mxu0 %v1457
  %1477 = vmatprep.subr.bf16.mxu0 0
  %1478 = vmatpush1.bf16.msra.mxu0 %v1456
  %1479 = vmatprep.subr.bf16.mxu0 0
  %1480 = vmatpush1.bf16.msra.mxu0 %v1455
  %1481 = vmatprep.subr.bf16.mxu0 0
  %1482 = vmatpush1.bf16.msra.mxu0 %v1454
  %1483 = vmatprep.subr.bf16.mxu0 0
  %1484 = vmatpush1.bf16.msra.mxu0 %v1453
  %1485 = vmatprep.subr.bf16.mxu0 0
  %1486 = vmatpush2.bf16.msra.mxu0 0
  %1487 = vmatprep.subr.bf16.mxu0 0
  %1488 = vmatpush2.bf16.msra.mxu0 0
  %1489 = vmatprep.subr.bf16.mxu0 0
  %1490 = vmatpush2.bf16.msra.mxu0 0
  %1491 = vmatprep.subr.bf16.mxu0 0
  %1492 = vmatpush2.bf16.msra.mxu0 0
  %1493 = vmatprep.subr.bf16.mxu0 0
  %1494 = vmatpush2.bf16.msra.mxu0 0
  %1495 = vmatprep.subr.bf16.mxu0 0
  %1496 = vmatpush2.bf16.msra.mxu0 0
  %1497 = vmatprep.subr.bf16.mxu0 0
  %1498 = vmatpush2.bf16.msra.mxu0 0
  %1499 = vmatprep.subr.bf16.mxu0 0
  %1500 = vmatpush2.bf16.msra.mxu0 0
  %1501 = vmatprep.mubr.bf16.mxu0 0
  %1502 = vmatmul.mubr.bf16.gmra.mxu0 %v1396
  %v1503 = vpop.f32.mrf.mxu0
  %v1504 = vadd.f32 0.0, %v1503
  %v1505 = vpop.f32.mrf.mxu0
  %v1506 = vpop.f32.mrf.mxu0
  %v1507 = vadd.f32 0.0, %v1506
  %v1508 = vpop.f32.mrf.mxu0
  %1509 = vmatprep.mubr.bf16.mxu0 0
  %1510 = vmatmul.mubr.bf16.gmra.mxu0 %v1397
  %v1511 = vpop.f32.mrf.mxu0
  %v1512 = vadd.f32 0.0, %v1511
  %v1513 = vpop.f32.mrf.mxu0
  %v1514 = vpop.f32.mrf.mxu0
  %v1515 = vadd.f32 0.0, %v1514
  %v1516 = vpop.f32.mrf.mxu0
  %1517 = vmatprep.mubr.bf16.mxu0 0
  %1518 = vmatmul.mubr.bf16.gmra.mxu0 %v1398
  %v1519 = vpop.f32.mrf.mxu0
  %v1520 = vadd.f32 0.0, %v1519
  %v1521 = vpop.f32.mrf.mxu0
  %v1522 = vpop.f32.mrf.mxu0
  %v1523 = vadd.f32 0.0, %v1522
  %v1524 = vpop.f32.mrf.mxu0
  %1525 = vmatprep.mubr.bf16.mxu0 0
  %1526 = vmatmul.mubr.bf16.gmra.mxu0 %v1399
  %v1527 = vpop.f32.mrf.mxu0
  %v1528 = vadd.f32 0.0, %v1527
  %v1529 = vpop.f32.mrf.mxu0
  %v1530 = vpop.f32.mrf.mxu0
  %v1531 = vadd.f32 0.0, %v1530
  %v1532 = vpop.f32.mrf.mxu0
  %1533 = vmatprep.mubr.bf16.mxu0 0
  %1534 = vmatmul.mubr.bf16.gmra.mxu0 %v1400
  %v1535 = vpop.f32.mrf.mxu0
  %v1536 = vadd.f32 0.0, %v1535
  %v1537 = vpop.f32.mrf.mxu0
  %v1538 = vpop.f32.mrf.mxu0
  %v1539 = vadd.f32 0.0, %v1538
  %v1540 = vpop.f32.mrf.mxu0
  %1541 = vmatprep.mubr.bf16.mxu0 0
  %1542 = vmatmul.mubr.bf16.gmra.mxu0 %v1401
  %v1543 = vpop.f32.mrf.mxu0
  %v1544 = vadd.f32 0.0, %v1543
  %v1545 = vpop.f32.mrf.mxu0
  %v1546 = vpop.f32.mrf.mxu0
  %v1547 = vadd.f32 0.0, %v1546
  %v1548 = vpop.f32.mrf.mxu0
  %1549 = vmatprep.mubr.bf16.mxu0 0
  %1550 = vmatmul.mubr.bf16.gmra.mxu0 %v1402
  %v1551 = vpop.f32.mrf.mxu0
  %v1552 = vadd.f32 0.0, %v1551
  %v1553 = vpop.f32.mrf.mxu0
  %v1554 = vpop.f32.mrf.mxu0
  %v1555 = vadd.f32 0.0, %v1554
  %v1556 = vpop.f32.mrf.mxu0
  %1557 = vmatprep.mubr.bf16.mxu0 0
  %1558 = vmatmul.mubr.bf16.gmra.mxu0 %v1403
  %v1559 = vpop.f32.mrf.mxu0
  %v1560 = vadd.f32 0.0, %v1559
  %v1561 = vpop.f32.mrf.mxu0
  %v1562 = vpop.f32.mrf.mxu0
  %v1563 = vadd.f32 0.0, %v1562
  %v1564 = vpop.f32.mrf.mxu0
  %1565 = vdwg.mxu0
  %v1566 = vadd.f32 %v1285, %v1504
  %v1567 = vadd.f32 %v1288, %v1507
  %v1568 = vadd.f32 %v1293, %v1512
  %v1569 = vadd.f32 %v1296, %v1515
  %v1570 = vadd.f32 %v1301, %v1520
  %v1571 = vadd.f32 %v1304, %v1523
  %v1572 = vadd.f32 %v1309, %v1528
  %v1573 = vadd.f32 %v1312, %v1531
  %v1574 = vadd.f32 %v1317, %v1536
  %v1575 = vadd.f32 %v1320, %v1539
  %v1576 = vadd.f32 %v1325, %v1544
  %v1577 = vadd.f32 %v1328, %v1547
  %v1578 = vadd.f32 %v1333, %v1552
  %v1579 = vadd.f32 %v1336, %v1555
  %v1580 = vadd.f32 %v1341, %v1560
  %v1581 = vadd.f32 %v1344, %v1563
  %v1582 = vlaneseq
  %v1583 = vshrl.u32 %v1582, 7
  %v1584 = vsub.s32 2, %v1583
  %v1585 = vrot.slane %v18, %v1584
  %v1586 = vadd.f32 %v1566, %v1585
  %v1587 = vadd.f32 %v1567, %v1585
  %v1588 = vadd.f32 %v1568, %v1585
  %v1589 = vadd.f32 %v1569, %v1585
  %v1590 = vadd.f32 %v1570, %v1585
  %v1591 = vadd.f32 %v1571, %v1585
  %v1592 = vadd.f32 %v1572, %v1585
  %v1593 = vadd.f32 %v1573, %v1585
  %v1594 = vadd.f32 %v1574, %v1585
  %v1595 = vadd.f32 %v1575, %v1585
  %v1596 = vadd.f32 %v1576, %v1585
  %v1597 = vadd.f32 %v1577, %v1585
  %v1598 = vadd.f32 %v1578, %v1585
  %v1599 = vadd.f32 %v1579, %v1585
  %v1600 = vadd.f32 %v1580, %v1585
  %v1601 = vadd.f32 %v1581, %v1585
  %v1602 = vmax.f32 %v1586, 0.0
  %v1603 = vmax.f32 %v1587, 0.0
  %v1604 = vmax.f32 %v1588, 0.0
  %v1605 = vmax.f32 %v1589, 0.0
  %v1606 = vmax.f32 %v1590, 0.0
  %v1607 = vmax.f32 %v1591, 0.0
  %v1608 = vmax.f32 %v1592, 0.0
  %v1609 = vmax.f32 %v1593, 0.0
  %v1610 = vmax.f32 %v1594, 0.0
  %v1611 = vmax.f32 %v1595, 0.0
  %v1612 = vmax.f32 %v1596, 0.0
  %v1613 = vmax.f32 %v1597, 0.0
  %v1614 = vmax.f32 %v1598, 0.0
  %v1615 = vmax.f32 %v1599, 0.0
  %v1616 = vmax.f32 %v1600, 0.0
  %v1617 = vmax.f32 %v1601, 0.0
  %v1618 = vlaneseq
  %v1619 = vshrl.u32 %v1618, 7
  %v1620 = vlaneseq
  %v1621 = vand.u32 %v1620, 127
  %v1622 = vshra.s32 %v1621, 4
  %vm1623 = vcmp.eq.s32.totalorder %v1622, %v1619
  %v1624 = vand.u32 %v1621, 15
  %vm1625 = vcmp.lt.s32.totalorder %v1624, 6
  %vm1626 = vmand %vm1623, %vm1625
  %v1627 = vsel %vm1626, 1.0, 0.0
  %v1628 = vpack.c.bf16 %v1627, %v1627
  %v1629 = vpack.c.bf16 %v1603, %v1602
  %v1630 = vpack.c.bf16 %v1605, %v1604
  %v1631 = vpack.c.bf16 %v1607, %v1606
  %v1632 = vpack.c.bf16 %v1609, %v1608
  %v1633 = vpack.c.bf16 %v1611, %v1610
  %v1634 = vpack.c.bf16 %v1613, %v1612
  %v1635 = vpack.c.bf16 %v1615, %v1614
  %v1636 = vpack.c.bf16 %v1617, %v1616
  %1637 = vmatprep.subr.bf16.mxu0 0
  %1638 = vmatpush1.bf16.msra.mxu0 %v1636
  %1639 = vmatprep.subr.bf16.mxu0 0
  %1640 = vmatpush1.bf16.msra.mxu0 %v1635
  %1641 = vmatprep.subr.bf16.mxu0 0
  %1642 = vmatpush1.bf16.msra.mxu0 %v1634
  %1643 = vmatprep.subr.bf16.mxu0 0
  %1644 = vmatpush1.bf16.msra.mxu0 %v1633
  %1645 = vmatprep.subr.bf16.mxu0 0
  %1646 = vmatpush1.bf16.msra.mxu0 %v1632
  %1647 = vmatprep.subr.bf16.mxu0 0
  %1648 = vmatpush1.bf16.msra.mxu0 %v1631
  %1649 = vmatprep.subr.bf16.mxu0 0
  %1650 = vmatpush1.bf16.msra.mxu0 %v1630
  %1651 = vmatprep.subr.bf16.mxu0 0
  %1652 = vmatpush1.bf16.msra.mxu0 %v1629
  %1653 = vmatprep.subr.bf16.mxu0 0
  %1654 = vmatpush2.bf16.msra.mxu0 0
  %1655 = vmatprep.subr.bf16.mxu0 0
  %1656 = vmatpush2.bf16.msra.mxu0 0
  %1657 = vmatprep.subr.bf16.mxu0 0
  %1658 = vmatpush2.bf16.msra.mxu0 0
  %1659 = vmatprep.subr.bf16.mxu0 0
  %1660 = vmatpush2.bf16.msra.mxu0 0
  %1661 = vmatprep.subr.bf16.mxu0 0
  %1662 = vmatpush2.bf16.msra.mxu0 0
  %1663 = vmatprep.subr.bf16.mxu0 0
  %1664 = vmatpush2.bf16.msra.mxu0 0
  %1665 = vmatprep.subr.bf16.mxu0 0
  %1666 = vmatpush2.bf16.msra.mxu0 0
  %1667 = vmatprep.subr.bf16.mxu0 0
  %1668 = vmatpush2.bf16.msra.mxu0 0
  %1669 = vmatprep.mubr.bf16.mxu0 0
  %1670 = vmatmul.mubr.bf16.gmra.mxu0 %v1628
  %v1671 = vpop.f32.mrf.mxu0
  %v1672 = vadd.f32 0.0, %v1671
  %v1673 = vpop.f32.mrf.mxu0
  %v1674 = vpop.f32.mrf.mxu0
  %v1675 = vpop.f32.mrf.mxu0
  %1676 = vdwg.mxu0
  %v1677 = vmul.f32 %v1672, 0.16666667
  %v1678 = vpack.c.bf16 %v1677, %v1677
  %s1679 = scalar_lea.vmem %s1, 448
  %v1680 = vld [vmem:[%s1679] sm:$0xf]
  %v1681 = vld [vmem:[%s1679 + $0x4] sm:$0xf]
  %v1682 = vld [vmem:[%s1679 + $0x8] sm:$0xf]
  %v1683 = vld [vmem:[%s1679 + $0xc] sm:$0xf]
  %v1684 = vld [vmem:[%s1679 + $0x10] sm:$0xf]
  %v1685 = vld [vmem:[%s1679 + $0x14] sm:$0xf]
  %v1686 = vld [vmem:[%s1679 + $0x18] sm:$0xf]
  %v1687 = vld [vmem:[%s1679 + $0x1c] sm:$0xf]
  %v1688 = vld [vmem:[%s1679 + $0x20] sm:$0xf]
  %v1689 = vld [vmem:[%s1679 + $0x24] sm:$0xf]
  %v1690 = vld [vmem:[%s1679 + $0x28] sm:$0xf]
  %v1691 = vld [vmem:[%s1679 + $0x2c] sm:$0xf]
  %v1692 = vld [vmem:[%s1679 + $0x30] sm:$0xf]
  %v1693 = vld [vmem:[%s1679 + $0x34] sm:$0xf]
  %v1694 = vld [vmem:[%s1679 + $0x38] sm:$0xf]
  %v1695 = vld [vmem:[%s1679 + $0x3c] sm:$0xf]
  %v1696 = vld [vmem:[%s3] sm:$0xff]
  %v1713 = vunpack.c.l.b16 %v1680
  %v1714 = vunpack.c.l.b16 %v1681
  %v1715 = vunpack.c.l.b16 %v1682
  %v1716 = vunpack.c.l.b16 %v1683
  %v1717 = vunpack.c.l.b16 %v1684
  %v1718 = vunpack.c.l.b16 %v1685
  %v1719 = vunpack.c.l.b16 %v1686
  %v1720 = vunpack.c.l.b16 %v1687
  %v1721 = vunpack.c.l.b16 %v1688
  %v1722 = vunpack.c.l.b16 %v1689
  %v1723 = vunpack.c.l.b16 %v1690
  %v1724 = vunpack.c.l.b16 %v1691
  %v1725 = vunpack.c.l.b16 %v1692
  %v1726 = vunpack.c.l.b16 %v1693
  %v1727 = vunpack.c.l.b16 %v1694
  %v1728 = vunpack.c.l.b16 %v1695
  %v1729 = vpack.c.b16 %v1714, %v1713
  %v1730 = vpack.c.b16 %v1716, %v1715
  %v1731 = vpack.c.b16 %v1718, %v1717
  %v1732 = vpack.c.b16 %v1720, %v1719
  %v1733 = vpack.c.b16 %v1722, %v1721
  %v1734 = vpack.c.b16 %v1724, %v1723
  %v1735 = vpack.c.b16 %v1726, %v1725
  %v1736 = vpack.c.b16 %v1728, %v1727
  %1745 = vmatprep.subr.bf16.mxu0 0
  %1746 = vmatpush1.bf16.msra.mxu0 %v1736
  %1747 = vmatprep.subr.bf16.mxu0 0
  %1748 = vmatpush1.bf16.msra.mxu0 %v1735
  %1749 = vmatprep.subr.bf16.mxu0 0
  %1750 = vmatpush1.bf16.msra.mxu0 %v1734
  %1751 = vmatprep.subr.bf16.mxu0 0
  %1752 = vmatpush1.bf16.msra.mxu0 %v1733
  %1753 = vmatprep.subr.bf16.mxu0 0
  %1754 = vmatpush1.bf16.msra.mxu0 %v1732
  %1755 = vmatprep.subr.bf16.mxu0 0
  %1756 = vmatpush1.bf16.msra.mxu0 %v1731
  %1757 = vmatprep.subr.bf16.mxu0 0
  %1758 = vmatpush1.bf16.msra.mxu0 %v1730
  %1759 = vmatprep.subr.bf16.mxu0 0
  %1760 = vmatpush1.bf16.msra.mxu0 %v1729
  %1761 = vmatprep.subr.bf16.mxu0 0
  %1762 = vmatpush2.bf16.msra.mxu0 0
  %1763 = vmatprep.subr.bf16.mxu0 0
  %1764 = vmatpush2.bf16.msra.mxu0 0
  %1765 = vmatprep.subr.bf16.mxu0 0
  %1766 = vmatpush2.bf16.msra.mxu0 0
  %1767 = vmatprep.subr.bf16.mxu0 0
  %1768 = vmatpush2.bf16.msra.mxu0 0
  %1769 = vmatprep.subr.bf16.mxu0 0
  %1770 = vmatpush2.bf16.msra.mxu0 0
  %1771 = vmatprep.subr.bf16.mxu0 0
  %1772 = vmatpush2.bf16.msra.mxu0 0
  %1773 = vmatprep.subr.bf16.mxu0 0
  %1774 = vmatpush2.bf16.msra.mxu0 0
  %1775 = vmatprep.subr.bf16.mxu0 0
  %1776 = vmatpush2.bf16.msra.mxu0 0
  %1777 = vmatprep.mubr.bf16.mxu0 0
  %1778 = vmatmul.mubr.bf16.gmra.mxu0 %v1678
  %v1779 = vpop.f32.mrf.mxu0
  %v1780 = vadd.f32 %v1696, %v1779
  %v1781 = vpop.f32.mrf.mxu0
  %v1782 = vpop.f32.mrf.mxu0
  %v1783 = vpop.f32.mrf.mxu0
  %1784 = vdwg.mxu0
  %v1785 = vlaneseq
  %v1786 = vshrl.u32 %v1785, 7
  %v1787 = vsub.s32 3, %v1786
  %v1788 = vrot.slane %v18, %v1787
  %v1789 = vadd.f32 %v1780, %v1788
  %v1790 = vmax.f32 %v1789, 0.0
  %v1791 = vpack.c.bf16 %v1790, %v1790
  %s1792 = scalar_lea.vmem %s1, 512
  %v1793 = vld [vmem:[%s1792] sm:$0xf]
  %v1794 = vld [vmem:[%s1792 + $0x4] sm:$0xf]
  %v1795 = vld [vmem:[%s1792 + $0x8] sm:$0xf]
  %v1796 = vld [vmem:[%s1792 + $0xc] sm:$0xf]
  %v1797 = vld [vmem:[%s1792 + $0x10] sm:$0xf]
  %v1798 = vld [vmem:[%s1792 + $0x14] sm:$0xf]
  %v1799 = vld [vmem:[%s1792 + $0x18] sm:$0xf]
  %v1800 = vld [vmem:[%s1792 + $0x1c] sm:$0xf]
  %v1801 = vld [vmem:[%s1792 + $0x20] sm:$0xf]
  %v1802 = vld [vmem:[%s1792 + $0x24] sm:$0xf]
  %v1803 = vld [vmem:[%s1792 + $0x28] sm:$0xf]
  %v1804 = vld [vmem:[%s1792 + $0x2c] sm:$0xf]
  %v1805 = vld [vmem:[%s1792 + $0x30] sm:$0xf]
  %v1806 = vld [vmem:[%s1792 + $0x34] sm:$0xf]
  %v1807 = vld [vmem:[%s1792 + $0x38] sm:$0xf]
  %v1808 = vld [vmem:[%s1792 + $0x3c] sm:$0xf]
  %v1809 = vlaneseq
  %v1810 = vshrl.u32 %v1809, 7
  %v1811 = vsub.s32 4, %v1810
  %v1812 = vrot.slane %v18, %v1811
  %v1829 = vunpack.c.l.b16 %v1793
  %v1830 = vunpack.c.l.b16 %v1794
  %v1831 = vunpack.c.l.b16 %v1795
  %v1832 = vunpack.c.l.b16 %v1796
  %v1833 = vunpack.c.l.b16 %v1797
  %v1834 = vunpack.c.l.b16 %v1798
  %v1835 = vunpack.c.l.b16 %v1799
  %v1836 = vunpack.c.l.b16 %v1800
  %v1837 = vunpack.c.l.b16 %v1801
  %v1838 = vunpack.c.l.b16 %v1802
  %v1839 = vunpack.c.l.b16 %v1803
  %v1840 = vunpack.c.l.b16 %v1804
  %v1841 = vunpack.c.l.b16 %v1805
  %v1842 = vunpack.c.l.b16 %v1806
  %v1843 = vunpack.c.l.b16 %v1807
  %v1844 = vunpack.c.l.b16 %v1808
  %v1845 = vpack.c.b16 %v1830, %v1829
  %v1846 = vpack.c.b16 %v1832, %v1831
  %v1847 = vpack.c.b16 %v1834, %v1833
  %v1848 = vpack.c.b16 %v1836, %v1835
  %v1849 = vpack.c.b16 %v1838, %v1837
  %v1850 = vpack.c.b16 %v1840, %v1839
  %v1851 = vpack.c.b16 %v1842, %v1841
  %v1852 = vpack.c.b16 %v1844, %v1843
  %1861 = vmatprep.subr.bf16.mxu0 0
  %1862 = vmatpush1.bf16.msra.mxu0 %v1852
  %1863 = vmatprep.subr.bf16.mxu0 0
  %1864 = vmatpush1.bf16.msra.mxu0 %v1851
  %1865 = vmatprep.subr.bf16.mxu0 0
  %1866 = vmatpush1.bf16.msra.mxu0 %v1850
  %1867 = vmatprep.subr.bf16.mxu0 0
  %1868 = vmatpush1.bf16.msra.mxu0 %v1849
  %1869 = vmatprep.subr.bf16.mxu0 0
  %1870 = vmatpush1.bf16.msra.mxu0 %v1848
  %1871 = vmatprep.subr.bf16.mxu0 0
  %1872 = vmatpush1.bf16.msra.mxu0 %v1847
  %1873 = vmatprep.subr.bf16.mxu0 0
  %1874 = vmatpush1.bf16.msra.mxu0 %v1846
  %1875 = vmatprep.subr.bf16.mxu0 0
  %1876 = vmatpush1.bf16.msra.mxu0 %v1845
  %1877 = vmatprep.subr.bf16.mxu0 0
  %1878 = vmatpush2.bf16.msra.mxu0 0
  %1879 = vmatprep.subr.bf16.mxu0 0
  %1880 = vmatpush2.bf16.msra.mxu0 0
  %1881 = vmatprep.subr.bf16.mxu0 0
  %1882 = vmatpush2.bf16.msra.mxu0 0
  %1883 = vmatprep.subr.bf16.mxu0 0
  %1884 = vmatpush2.bf16.msra.mxu0 0
  %1885 = vmatprep.subr.bf16.mxu0 0
  %1886 = vmatpush2.bf16.msra.mxu0 0
  %1887 = vmatprep.subr.bf16.mxu0 0
  %1888 = vmatpush2.bf16.msra.mxu0 0
  %1889 = vmatprep.subr.bf16.mxu0 0
  %1890 = vmatpush2.bf16.msra.mxu0 0
  %1891 = vmatprep.subr.bf16.mxu0 0
  %1892 = vmatpush2.bf16.msra.mxu0 0
  %1893 = vmatprep.mubr.bf16.mxu0 0
  %1894 = vmatmul.mubr.bf16.gmra.mxu0 %v1791
  %v1895 = vpop.f32.mrf.mxu0
  %v1896 = vadd.f32 %v1812, %v1895
  %v1897 = vpop.f32.mrf.mxu0
  %v1898 = vpop.f32.mrf.mxu0
  %v1899 = vpop.f32.mrf.mxu0
  %1900 = vdwg.mxu0
  %v1901 = vmax.f32 %v1896, 0.0
  %v1902 = vpack.c.bf16 %v1901, %v1901
  %s1903 = scalar_lea.vmem %s1, 576
  %v1904 = vld [vmem:[%s1903] sm:$0xf]
  %v1905 = vld [vmem:[%s1903 + $0x4] sm:$0xf]
  %v1906 = vld [vmem:[%s1903 + $0x8] sm:$0xf]
  %v1907 = vld [vmem:[%s1903 + $0xc] sm:$0xf]
  %v1908 = vld [vmem:[%s1903 + $0x10] sm:$0xf]
  %v1909 = vld [vmem:[%s1903 + $0x14] sm:$0xf]
  %v1910 = vld [vmem:[%s1903 + $0x18] sm:$0xf]
  %v1911 = vld [vmem:[%s1903 + $0x1c] sm:$0xf]
  %v1912 = vld [vmem:[%s1903 + $0x20] sm:$0xf]
  %v1913 = vld [vmem:[%s1903 + $0x24] sm:$0xf]
  %v1914 = vld [vmem:[%s1903 + $0x28] sm:$0xf]
  %v1915 = vld [vmem:[%s1903 + $0x2c] sm:$0xf]
  %v1916 = vld [vmem:[%s1903 + $0x30] sm:$0xf]
  %v1917 = vld [vmem:[%s1903 + $0x34] sm:$0xf]
  %v1918 = vld [vmem:[%s1903 + $0x38] sm:$0xf]
  %v1919 = vld [vmem:[%s1903 + $0x3c] sm:$0xf]
  %v1920 = vlaneseq
  %v1921 = vshrl.u32 %v1920, 7
  %v1922 = vsub.s32 5, %v1921
  %v1923 = vrot.slane %v18, %v1922
  %v1940 = vunpack.c.l.b16 %v1904
  %v1941 = vunpack.c.l.b16 %v1905
  %v1942 = vunpack.c.l.b16 %v1906
  %v1943 = vunpack.c.l.b16 %v1907
  %v1944 = vunpack.c.l.b16 %v1908
  %v1945 = vunpack.c.l.b16 %v1909
  %v1946 = vunpack.c.l.b16 %v1910
  %v1947 = vunpack.c.l.b16 %v1911
  %v1948 = vunpack.c.l.b16 %v1912
  %v1949 = vunpack.c.l.b16 %v1913
  %v1950 = vunpack.c.l.b16 %v1914
  %v1951 = vunpack.c.l.b16 %v1915
  %v1952 = vunpack.c.l.b16 %v1916
  %v1953 = vunpack.c.l.b16 %v1917
  %v1954 = vunpack.c.l.b16 %v1918
  %v1955 = vunpack.c.l.b16 %v1919
  %v1956 = vpack.c.b16 %v1941, %v1940
  %v1957 = vpack.c.b16 %v1943, %v1942
  %v1958 = vpack.c.b16 %v1945, %v1944
  %v1959 = vpack.c.b16 %v1947, %v1946
  %v1960 = vpack.c.b16 %v1949, %v1948
  %v1961 = vpack.c.b16 %v1951, %v1950
  %v1962 = vpack.c.b16 %v1953, %v1952
  %v1963 = vpack.c.b16 %v1955, %v1954
  %1972 = vmatprep.subr.bf16.mxu0 0
  %1973 = vmatpush1.bf16.msra.mxu0 %v1963
  %1974 = vmatprep.subr.bf16.mxu0 0
  %1975 = vmatpush1.bf16.msra.mxu0 %v1962
  %1976 = vmatprep.subr.bf16.mxu0 0
  %1977 = vmatpush1.bf16.msra.mxu0 %v1961
  %1978 = vmatprep.subr.bf16.mxu0 0
  %1979 = vmatpush1.bf16.msra.mxu0 %v1960
  %1980 = vmatprep.subr.bf16.mxu0 0
  %1981 = vmatpush1.bf16.msra.mxu0 %v1959
  %1982 = vmatprep.subr.bf16.mxu0 0
  %1983 = vmatpush1.bf16.msra.mxu0 %v1958
  %1984 = vmatprep.subr.bf16.mxu0 0
  %1985 = vmatpush1.bf16.msra.mxu0 %v1957
  %1986 = vmatprep.subr.bf16.mxu0 0
  %1987 = vmatpush1.bf16.msra.mxu0 %v1956
  %1988 = vmatprep.subr.bf16.mxu0 0
  %1989 = vmatpush2.bf16.msra.mxu0 0
  %1990 = vmatprep.subr.bf16.mxu0 0
  %1991 = vmatpush2.bf16.msra.mxu0 0
  %1992 = vmatprep.subr.bf16.mxu0 0
  %1993 = vmatpush2.bf16.msra.mxu0 0
  %1994 = vmatprep.subr.bf16.mxu0 0
  %1995 = vmatpush2.bf16.msra.mxu0 0
  %1996 = vmatprep.subr.bf16.mxu0 0
  %1997 = vmatpush2.bf16.msra.mxu0 0
  %1998 = vmatprep.subr.bf16.mxu0 0
  %1999 = vmatpush2.bf16.msra.mxu0 0
  %2000 = vmatprep.subr.bf16.mxu0 0
  %2001 = vmatpush2.bf16.msra.mxu0 0
  %2002 = vmatprep.subr.bf16.mxu0 0
  %2003 = vmatpush2.bf16.msra.mxu0 0
  %2004 = vmatprep.mubr.bf16.mxu0 0
  %2005 = vmatmul.mubr.bf16.gmra.mxu0 %v1902
  %v2006 = vpop.f32.mrf.mxu0
  %v2007 = vadd.f32 %v1923, %v2006
  %v2008 = vpop.f32.mrf.mxu0
  %v2009 = vpop.f32.mrf.mxu0
  %v2010 = vpop.f32.mrf.mxu0
  %2011 = vdwg.mxu0
  %vm2012 = vcmp.lt.s32.totalorder %v1621, 3
  %v2013 = vsel %vm2012, %v2007, -1e+30
  %2014 = vmax.xlane.f32.xlu0 %v2013
  %v2015 = vpop.xlane.xlu0 %2014
  %v2016 = vsub.f32 %v2013, %v2015
  %v2017 = vmul.f32 %v2016, 1.442695
  %v2018 = vpow.pop %v2017
  %2019 = vadd.xlane.f32.xlu0 %v2018
  %v2020 = vpop.xlane.xlu0 %2019
  %v2021 = vrcp.pop %v2020
  %v2022 = vmul.f32 %v2018, %v2021
  %v2023 = vsel %vm2012, %v2022, %v2007
  %2024 = vst [vmem:[%s4] sm:$0xff] %v2023
  // Predicated region
  $region18: #{actor_critic_forward.1} parent=0 // pred_check
    _
  $region19: #{actor_critic_forward.1} parent=0 // pred_check_branch
    %2026 = sbr.rel (0) target = $region21
  $region20: #{actor_critic_forward.1} parent=0 // pred_region
    _
  $region21: #{actor_critic_forward.1} parent=0 // pred_fallthru
    _
  // Predicated region
  $region22: #{actor_critic_forward.1} parent=0 // pred_check
    _
  $region23: #{actor_critic_forward.1} parent=0 // pred_check_branch
    %2028 = sbr.rel (0) target = $region25
  $region24: #{actor_critic_forward.1} parent=0 // pred_region
    _
  $region25: #{actor_critic_forward.1} parent=0 // pred_fallthru
    _

</llo_original>
